<compile_context>
chip_gen: v7x
topology: tpu7x:2x2x1
jax: 0.10.0
libtpu: 0.0.40
codegen_flags: <defaults>
</compile_context>

<pallas_src>
import functools

import numpy as np
import jax
import jax.numpy as jnp
from jax.experimental import pallas as pl
from jax.experimental.pallas import tpu as pltpu

LN_EPS = 1e-5        # torch.nn.LayerNorm default
NEG_INF = -1e30      # large finite negative instead of -inf


# ------------------------------- fused kernel --------------------------------

def _coattn_kernel(q_ref, v_ref, wq_ref, wk_ref, wvqf_ref, wvvf_ref,
                   rqv_ref, rvq_ref, oq_ref, ov_ref, *, B, Lq, Lv, scale):
    D = wq_ref.shape[0]
    f32 = jnp.float32

    def dot(a, b):
        return jnp.dot(a, b, preferred_element_type=f32)

    def dot_nt(a, b):                           # a @ b.T without materializing a transpose
        return jax.lax.dot_general(a, b, (((1,), (1,)), ((), ())),
                                   preferred_element_type=f32)

    q_all = q_ref[...]                          # (B*Lq, D)
    v_all = v_ref[...]                          # (B*Lv, D)

    # [4] projections hoisted out of the batch loop; [2] final projections pre-folded into the
    # value weights; [5] four separate (D, D) matmuls (no lane-concat / non-128 slices).
    qq_all  = dot(q_all, wq_ref[...])           # (B*Lq, D)  linear_question
    vk_all  = dot(v_all, wk_ref[...])           # (B*Lv, D)  linear_video
    qvf_all = dot(q_all, wvqf_ref[...])         # (B*Lq, D)  linear_final_vq(linear_v_question(.))
    vvf_all = dot(v_all, wvvf_ref[...])         # (B*Lv, D)  linear_final_qv(linear_v_video(.))

    ones_row = jnp.ones((1, D), f32)

    def masked_softmax(s, key_pad, query_pad):
        s = jnp.where(key_pad, NEG_INF, s)                         # masked_fill(attn_mask, -inf)
        p = jnp.exp(s - jnp.max(s, axis=-1, keepdims=True))
        denom = jnp.sum(p, axis=-1, keepdims=True)                 # >= 1 by construction
        # [8] EUP approximate reciprocal + one Newton step keeps the divide off the VALU while
        # retaining f32 accuracy (the step is 3 VPU ops on a (rows, 1) vector).
        inv = pl.reciprocal(denom, approx=True)
        inv = inv * (2.0 - denom * inv)
        attn = p * inv                                             # softmax(dim=-1)
        return jnp.where(query_pad, 0.0, attn)                     # masked_fill(softmax_mask, 0)

    def layer_norm(y):                                             # elementwise_affine=False
        mean = jnp.mean(y, axis=-1, keepdims=True)
        var = jnp.mean((y - mean) ** 2, axis=-1, keepdims=True)
        return (y - mean) * jax.lax.rsqrt(var + LN_EPS)

    # B is tiny and static -> unrolled; every op below is a plain 2-D op.
    for b in range(B):
        q   = q_all[b * Lq:(b + 1) * Lq]        # (Lq, D) residual source
        v   = v_all[b * Lv:(b + 1) * Lv]        # (Lv, D) residual source
        qq  = qq_all[b * Lq:(b + 1) * Lq]
        vk  = vk_all[b * Lv:(b + 1) * Lv]
        qvf = qvf_all[b * Lq:(b + 1) * Lq]
        vvf = vvf_all[b * Lv:(b + 1) * Lv]

        # [1] padding masks without the full ones-matmuls.  Row-oriented (query) masks are lane
        # reductions; lane-oriented (key) masks use a single-row ones matmul so the per-key sums
        # come out already in lane orientation (no standalone small transpose).
        q_pad_row = jnp.sum(q, axis=-1, keepdims=True) == 0.0      # (Lq, 1) question pos padded
        v_pad_row = jnp.sum(v, axis=-1, keepdims=True) == 0.0      # (Lv, 1) video pos padded
        v_pad_col = dot_nt(ones_row, v) == 0.0                     # (1, Lv) video key padded
        q_pad_col = dot_nt(ones_row, q) == 0.0                     # (1, Lq) question key padded

        # real attention branches
        s_qv = dot_nt(qq, vk) * scale                              # (Lq, Lv)
        s_vq = dot_nt(vk, qq) * scale                              # (Lv, Lq)
        att_qv = masked_softmax(s_qv, v_pad_col, q_pad_row)
        att_vq = masked_softmax(s_vq, q_pad_col, v_pad_row)
        # counter branches: uniform(0,1) noise through the same scale/mask/softmax path
        att_qv_c = masked_softmax(rqv_ref[b] * scale, v_pad_col, q_pad_row)
        att_vq_c = masked_softmax(rvq_ref[b] * scale, q_pad_col, v_pad_row)

        # [3] stack real + counter along rows (Lq, Lv are multiples of 8 -> sublane-aligned, free)
        # so context + (folded) final projection is one MXU matmul per stream per batch.
        fin_q = dot(jnp.concatenate([att_qv, att_qv_c], axis=0), vvf)   # (2*Lq, D)
        fin_v = dot(jnp.concatenate([att_vq, att_vq_c], axis=0), qvf)   # (2*Lv, D)

        # residual + LayerNorm; [6] lane-pack [real | counter] into one 2D-wide slab per stream.
        oq_ref[b] = jnp.concatenate(
            [layer_norm(fin_q[:Lq] + q), layer_norm(fin_q[Lq:] + q)], axis=-1)   # (Lq, 2D)
        ov_ref[b] = jnp.concatenate(
            [layer_norm(fin_v[:Lv] + v), layer_norm(fin_v[Lv:] + v)], axis=-1)   # (Lv, 2D)


# ----------------------------------- wrapper ----------------------------------

def co_attention_layer_counter(kparams, question, video, rand_qv, rand_vq):
    B, Lq, D = question.shape
    Lv = video.shape[1]
    kern = functools.partial(_coattn_kernel, B=B, Lq=Lq, Lv=Lv, scale=float(D) ** (-0.5))

    def full(shape):
        n = len(shape)
        return pl.BlockSpec(tuple(shape), lambda *_, n=n: (0,) * n)

    # [4] flatten (B, L, D) -> (B*L, D) outside the kernel (free leading-dim reshape) so the
    # projections run once over all batches.
    q2d = question.reshape(B * Lq, D)
    v2d = video.reshape(B * Lv, D)

    out_shape = (jax.ShapeDtypeStruct((B, Lq, 2 * D), jnp.float32),   # [out_q | out_q_counter]
                 jax.ShapeDtypeStruct((B, Lv, 2 * D), jnp.float32))   # [out_v | out_v_counter]
    oq_packed, ov_packed = pl.pallas_call(
        kern,
        out_shape=out_shape,
        grid=(1,),
        in_specs=[full((B * Lq, D)), full((B * Lv, D)),
                  full((D, D)), full((D, D)), full((D, D)), full((D, D)),
                  full((B, Lq, Lv)), full((B, Lv, Lq))],
        out_specs=(full((B, Lq, 2 * D)), full((B, Lv, 2 * D))),
        compiler_params=pltpu.CompilerParams(dimension_semantics=("arbitrary",)),
    )(q2d, v2d, kparams['wq_t'], kparams['wk_t'], kparams['wvqf'], kparams['wvvf'],
      rand_qv, rand_vq)

    # [6] split the lane-packed slabs back into the module's four outputs (cheap XLA slices).
    out_q, out_qc = oq_packed[..., :D], oq_packed[..., D:]
    out_v, out_vc = ov_packed[..., :D], ov_packed[..., D:]
    return out_q, out_v, out_qc, out_vc


# ------------------------------ params / reference ---------------------------

def init_raw_params(key, D):
    """Raw torch-layout (out, in) weights for the six bias-free linears."""
    ks = jax.random.split(key, 6)
    w = lambda k: jax.random.normal(k, (D, D), jnp.float32) * (D ** -0.5)
    Wq, Wk, Wvq, Wvv, Wfqv, Wfvq = (w(k) for k in ks)
    return dict(Wq=Wq, Wk=Wk, Wvq=Wvq, Wvv=Wvv, Wfqv=Wfqv, Wfvq=Wfvq)


def prepare_kernel_params(raw):
    """Kernel weights: pre-transposed to (in, out); [2] final projections folded into the value
    projections (pure linear chain, dropout_p=0)."""
    return dict(wq_t=raw['Wq'].T,
                wk_t=raw['Wk'].T,
                wvqf=raw['Wvq'].T @ raw['Wfvq'].T,   # linear_v_question then linear_final_vq
                wvvf=raw['Wvv'].T @ raw['Wfqv'].T)   # linear_v_video    then linear_final_qv


def _reference_forward(raw, question, video, rand_qv, rand_vq):
    """Pure-JAX mirror of the PyTorch forward (dropout_p=0, unfolded weights)."""
    D = question.shape[-1]
    scale = D ** -0.5
    attn_mask = jnp.einsum('bqd,bkd->bqk', jnp.ones_like(question), video) == 0
    softmax_mask = jnp.einsum('bqd,bkd->bqk', question, jnp.ones_like(video)) == 0
    attn_mask_ = jnp.einsum('bqd,bkd->bqk', jnp.ones_like(video), question) == 0
    softmax_mask_ = jnp.einsum('bqd,bkd->bqk', video, jnp.ones_like(question)) == 0
    question_q = question @ raw['Wq'].T
    video_k = video @ raw['Wk'].T
    question_v = question @ raw['Wvq'].T
    video_v = video @ raw['Wvv'].T

    def msm(s, am, sm):
        s = jnp.where(am, NEG_INF, s)
        a = jax.nn.softmax(s, axis=-1)
        return jnp.where(sm, 0.0, a)

    def ln(y):
        m = jnp.mean(y, -1, keepdims=True)
        var = jnp.mean((y - m) ** 2, -1, keepdims=True)
        return (y - m) / jnp.sqrt(var + LN_EPS)

    a_qv = msm(jnp.einsum('bqd,bkd->bqk', question_q, video_k) * scale, attn_mask, softmax_mask)
    a_vq = msm(jnp.einsum('bqd,bkd->bqk', video_k, question_q) * scale, attn_mask_, softmax_mask_)
    a_qv_c = msm(rand_qv * scale, attn_mask, softmax_mask)
    a_vq_c = msm(rand_vq * scale, attn_mask_, softmax_mask_)
    out_q = ln((a_qv @ video_v) @ raw['Wfqv'].T + question)
    out_v = ln((a_vq @ question_v) @ raw['Wfvq'].T + video)
    out_qc = ln((a_qv_c @ video_v) @ raw['Wfqv'].T + question)
    out_vc = ln((a_vq_c @ question_v) @ raw['Wfvq'].T + video)
    return out_q, out_v, out_qc, out_vc


# ----------------------------------- main -------------------------------------

if __name__ == "__main__":
    B, Lq, Lv, D = 2, 8, 16, 32
    key = jax.random.PRNGKey(0)
    kq, kv, kp, k1, k2 = jax.random.split(key, 5)

    question = jax.random.normal(kq, (B, Lq, D), jnp.float32)
    video = jax.random.normal(kv, (B, Lv, D), jnp.float32)
    # the module detects padding via feature-sum == 0 -> zero out positions past valid length
    q_len = jnp.array([Lq, 5], jnp.int32)
    v_len = jnp.array([Lv, 11], jnp.int32)
    question = question * (jnp.arange(Lq)[None, :, None] < q_len[:, None, None]).astype(jnp.float32)
    video = video * (jnp.arange(Lv)[None, :, None] < v_len[:, None, None]).astype(jnp.float32)

    # TODO(synk): torch's in-place .uniform_(0,1) RNG stream is not reproducible; the counter
    # noise is generated here with jax.random and fed to the kernel as an input.
    rand_qv = jax.random.uniform(k1, (B, Lq, Lv), jnp.float32)
    rand_vq = jax.random.uniform(k2, (B, Lv, Lq), jnp.float32)

    raw = init_raw_params(kp, D)
    kparams = prepare_kernel_params(raw)

    fwd = jax.jit(functools.partial(co_attention_layer_counter, kparams))
    out_q, out_v, out_qc, out_vc = fwd(question, video, rand_qv, rand_vq)
    jax.block_until_ready((out_q, out_v, out_qc, out_vc))

    assert out_q.shape == (B, Lq, D) and out_qc.shape == (B, Lq, D)
    assert out_v.shape == (B, Lv, D) and out_vc.shape == (B, Lv, D)
    for t in (out_q, out_v, out_qc, out_vc):
        assert bool(jnp.isfinite(t).all())

    # reference uses the raw (unfolded) weights -> also validates the weight-fold within tolerance
    ref = _reference_forward(raw, question, video, rand_qv, rand_vq)
    for got, want in zip((out_q, out_v, out_qc, out_vc), ref):
        np.testing.assert_allclose(np.asarray(got), np.asarray(want), rtol=2e-3, atol=2e-3)

    print("KERNEL_OK")
</pallas_src>

<mosaic_0001>
module attributes {stable_mosaic.version = 11 : i64} {
  func.func @_coattn_kernel(%arg0: i32, %arg1: memref<16x32xf32, #tpu.memory_space<vmem>>, %arg2: memref<32x32xf32, #tpu.memory_space<vmem>>, %arg3: memref<32x32xf32, #tpu.memory_space<vmem>>, %arg4: memref<32x32xf32, #tpu.memory_space<vmem>>, %arg5: memref<32x32xf32, #tpu.memory_space<vmem>>, %arg6: memref<32x32xf32, #tpu.memory_space<vmem>>, %arg7: memref<2x8x16xf32, #tpu.memory_space<vmem>>, %arg8: memref<2x16x8xf32, #tpu.memory_space<vmem>>, %arg9: memref<2x8x64xf32, #tpu.memory_space<vmem>>, %arg10: memref<2x16x64xf32, #tpu.memory_space<vmem>>) attributes {dimension_semantics = [#tpu.dimension_semantics<arbitrary>], iteration_bounds = array<i64: 1>, scalar_prefetch = 0 : i64, scratch_operands = 0 : i64, tpu.core_type = #tpu.core_type<tc>, window_params = [{pipeline_mode = #tpu.pipeline_mode<synchronous>, transform_indices = @transform_0, window_bounds = array<i64: 16, 32>}, {pipeline_mode = #tpu.pipeline_mode<synchronous>, transform_indices = @transform_1, window_bounds = array<i64: 32, 32>}, {pipeline_mode = #tpu.pipeline_mode<synchronous>, transform_indices = @transform_2, window_bounds = array<i64: 32, 32>}, {pipeline_mode = #tpu.pipeline_mode<synchronous>, transform_indices = @transform_3, window_bounds = array<i64: 32, 32>}, {pipeline_mode = #tpu.pipeline_mode<synchronous>, transform_indices = @transform_4, window_bounds = array<i64: 32, 32>}, {pipeline_mode = #tpu.pipeline_mode<synchronous>, transform_indices = @transform_5, window_bounds = array<i64: 32, 32>}, {pipeline_mode = #tpu.pipeline_mode<synchronous>, transform_indices = @transform_6, window_bounds = array<i64: 2, 8, 16>}, {pipeline_mode = #tpu.pipeline_mode<synchronous>, transform_indices = @transform_7, window_bounds = array<i64: 2, 16, 8>}, {pipeline_mode = #tpu.pipeline_mode<synchronous>, transform_indices = @transform_8, window_bounds = array<i64: 2, 8, 64>}, {pipeline_mode = #tpu.pipeline_mode<synchronous>, transform_indices = @transform_9, window_bounds = array<i64: 2, 16, 64>}]} {
    %c0 = arith.constant 0 : index
    %c0_0 = arith.constant 0 : index
    %0 = vector.load %arg1[%c0, %c0_0] : memref<16x32xf32, #tpu.memory_space<vmem>>, vector<16x32xf32>
    %c0_1 = arith.constant 0 : index
    %c0_2 = arith.constant 0 : index
    %1 = vector.load %arg2[%c0_1, %c0_2] : memref<32x32xf32, #tpu.memory_space<vmem>>, vector<32x32xf32>
    %c0_3 = arith.constant 0 : index
    %c0_4 = arith.constant 0 : index
    %2 = vector.load %arg3[%c0_3, %c0_4] : memref<32x32xf32, #tpu.memory_space<vmem>>, vector<32x32xf32>
    %cst = arith.constant dense<0.000000e+00> : vector<16x32xf32>
    %3 = tpu.matmul %0, %2, %cst {dimension_numbers = #tpu.dot_dimension_numbers<[1], [0], [0], [1], [0, 0, 1, 1], [], []>} : vector<16x32xf32>, vector<32x32xf32>, vector<16x32xf32> -> vector<16x32xf32>
    %c0_5 = arith.constant 0 : index
    %c0_6 = arith.constant 0 : index
    %4 = vector.load %arg4[%c0_5, %c0_6] : memref<32x32xf32, #tpu.memory_space<vmem>>, vector<32x32xf32>
    %cst_7 = arith.constant dense<0.000000e+00> : vector<32x32xf32>
    %5 = tpu.matmul %1, %4, %cst_7 {dimension_numbers = #tpu.dot_dimension_numbers<[1], [0], [0], [1], [0, 0, 1, 1], [], []>} : vector<32x32xf32>, vector<32x32xf32>, vector<32x32xf32> -> vector<32x32xf32>
    %c0_8 = arith.constant 0 : index
    %c0_9 = arith.constant 0 : index
    %6 = vector.load %arg5[%c0_8, %c0_9] : memref<32x32xf32, #tpu.memory_space<vmem>>, vector<32x32xf32>
    %cst_10 = arith.constant dense<0.000000e+00> : vector<16x32xf32>
    %7 = tpu.matmul %0, %6, %cst_10 {dimension_numbers = #tpu.dot_dimension_numbers<[1], [0], [0], [1], [0, 0, 1, 1], [], []>} : vector<16x32xf32>, vector<32x32xf32>, vector<16x32xf32> -> vector<16x32xf32>
    %c0_11 = arith.constant 0 : index
    %c0_12 = arith.constant 0 : index
    %8 = vector.load %arg6[%c0_11, %c0_12] : memref<32x32xf32, #tpu.memory_space<vmem>>, vector<32x32xf32>
    %cst_13 = arith.constant dense<0.000000e+00> : vector<32x32xf32>
    %9 = tpu.matmul %1, %8, %cst_13 {dimension_numbers = #tpu.dot_dimension_numbers<[1], [0], [0], [1], [0, 0, 1, 1], [], []>} : vector<32x32xf32>, vector<32x32xf32>, vector<32x32xf32> -> vector<32x32xf32>
    %cst_14 = arith.constant 1.000000e+00 : f32
    %10 = vector.broadcast %cst_14 : f32 to vector<1x32xf32>
    %11 = vector.extract_strided_slice %0 {offsets = [0, 0], sizes = [8, 32], strides = [1, 1]} : vector<16x32xf32> to vector<8x32xf32>
    %12 = vector.extract_strided_slice %1 {offsets = [0, 0], sizes = [16, 32], strides = [1, 1]} : vector<32x32xf32> to vector<16x32xf32>
    %13 = vector.extract_strided_slice %3 {offsets = [0, 0], sizes = [8, 32], strides = [1, 1]} : vector<16x32xf32> to vector<8x32xf32>
    %14 = vector.extract_strided_slice %5 {offsets = [0, 0], sizes = [16, 32], strides = [1, 1]} : vector<32x32xf32> to vector<16x32xf32>
    %15 = vector.extract_strided_slice %7 {offsets = [0, 0], sizes = [8, 32], strides = [1, 1]} : vector<16x32xf32> to vector<8x32xf32>
    %16 = vector.extract_strided_slice %9 {offsets = [0, 0], sizes = [16, 32], strides = [1, 1]} : vector<32x32xf32> to vector<16x32xf32>
    %cst_15 = arith.constant dense<0.000000e+00> : vector<8xf32>
    %17 = vector.multi_reduction <add>, %11, %cst_15 [1] : vector<8x32xf32> to vector<8xf32>
    %18 = vector.shape_cast %17 : vector<8xf32> to vector<8x1xf32>
    %cst_16 = arith.constant 0.000000e+00 : f32
    %19 = vector.broadcast %cst_16 : f32 to vector<8x1xf32>
    %20 = arith.cmpf oeq, %18, %19 : vector<8x1xf32>
    %cst_17 = arith.constant dense<0.000000e+00> : vector<16xf32>
    %21 = vector.multi_reduction <add>, %12, %cst_17 [1] : vector<16x32xf32> to vector<16xf32>
    %22 = vector.shape_cast %21 : vector<16xf32> to vector<16x1xf32>
    %cst_18 = arith.constant 0.000000e+00 : f32
    %23 = vector.broadcast %cst_18 : f32 to vector<16x1xf32>
    %24 = arith.cmpf oeq, %22, %23 : vector<16x1xf32>
    %cst_19 = arith.constant dense<0.000000e+00> : vector<1x16xf32>
    %25 = tpu.matmul %10, %12, %cst_19 {dimension_numbers = #tpu.dot_dimension_numbers<[1], [1], [0], [0], [0, 0, 1, 0], [], []>} : vector<1x32xf32>, vector<16x32xf32>, vector<1x16xf32> -> vector<1x16xf32>
    %cst_20 = arith.constant 0.000000e+00 : f32
    %26 = vector.broadcast %cst_20 : f32 to vector<1x16xf32>
    %27 = arith.cmpf oeq, %25, %26 : vector<1x16xf32>
    %cst_21 = arith.constant dense<0.000000e+00> : vector<1x8xf32>
    %28 = tpu.matmul %10, %11, %cst_21 {dimension_numbers = #tpu.dot_dimension_numbers<[1], [1], [0], [0], [0, 0, 1, 0], [], []>} : vector<1x32xf32>, vector<8x32xf32>, vector<1x8xf32> -> vector<1x8xf32>
    %cst_22 = arith.constant 0.000000e+00 : f32
    %29 = vector.broadcast %cst_22 : f32 to vector<1x8xf32>
    %30 = arith.cmpf oeq, %28, %29 : vector<1x8xf32>
    %cst_23 = arith.constant dense<0.000000e+00> : vector<8x16xf32>
    %31 = tpu.matmul %13, %14, %cst_23 {dimension_numbers = #tpu.dot_dimension_numbers<[1], [1], [0], [0], [0, 0, 1, 0], [], []>} : vector<8x32xf32>, vector<16x32xf32>, vector<8x16xf32> -> vector<8x16xf32>
    %cst_24 = arith.constant 0.176776692 : f32
    %32 = vector.broadcast %cst_24 : f32 to vector<8x16xf32>
    %33 = arith.mulf %31, %32 : vector<8x16xf32>
    %cst_25 = arith.constant dense<0.000000e+00> : vector<16x8xf32>
    %34 = tpu.matmul %14, %13, %cst_25 {dimension_numbers = #tpu.dot_dimension_numbers<[1], [1], [0], [0], [0, 0, 1, 0], [], []>} : vector<16x32xf32>, vector<8x32xf32>, vector<16x8xf32> -> vector<16x8xf32>
    %cst_26 = arith.constant 0.176776692 : f32
    %35 = vector.broadcast %cst_26 : f32 to vector<16x8xf32>
    %36 = arith.mulf %34, %35 : vector<16x8xf32>
    %cst_27 = arith.constant -1.000000e+30 : f32
    %37 = vector.shape_cast %27 : vector<1x16xi1> to vector<1x16xi1>
    %38 = vector.broadcast %37 : vector<1x16xi1> to vector<8x16xi1>
    %39 = vector.broadcast %cst_27 : f32 to vector<8x16xf32>
    %40 = arith.select %38, %39, %33 : vector<8x16xi1>, vector<8x16xf32>
    %cst_28 = arith.constant dense<0xFF800000> : vector<8xf32>
    %41 = vector.multi_reduction <maximumf>, %40, %cst_28 [1] : vector<8x16xf32> to vector<8xf32>
    %42 = vector.shape_cast %41 : vector<8xf32> to vector<8x1xf32>
    %43 = vector.broadcast %42 : vector<8x1xf32> to vector<8x16xf32>
    %44 = arith.subf %40, %43 : vector<8x16xf32>
    %45 = math.exp %44 : vector<8x16xf32>
    %cst_29 = arith.constant dense<0.000000e+00> : vector<8xf32>
    %46 = vector.multi_reduction <add>, %45, %cst_29 [1] : vector<8x16xf32> to vector<8xf32>
    %47 = vector.shape_cast %46 : vector<8xf32> to vector<8x1xf32>
    %48 = tpu.reciprocal %47 {approx = true} : vector<8x1xf32> -> vector<8x1xf32>
    %49 = arith.mulf %47, %48 : vector<8x1xf32>
    %cst_30 = arith.constant 2.000000e+00 : f32
    %50 = vector.broadcast %cst_30 : f32 to vector<8x1xf32>
    %51 = arith.subf %50, %49 : vector<8x1xf32>
    %52 = arith.mulf %48, %51 : vector<8x1xf32>
    %53 = vector.broadcast %52 : vector<8x1xf32> to vector<8x16xf32>
    %54 = arith.mulf %45, %53 : vector<8x16xf32>
    %cst_31 = arith.constant 0.000000e+00 : f32
    %55 = vector.shape_cast %20 : vector<8x1xi1> to vector<8x1xi1>
    %56 = vector.broadcast %55 : vector<8x1xi1> to vector<8x16xi1>
    %57 = vector.broadcast %cst_31 : f32 to vector<8x16xf32>
    %58 = arith.select %56, %57, %54 : vector<8x16xi1>, vector<8x16xf32>
    %cst_32 = arith.constant -1.000000e+30 : f32
    %59 = vector.shape_cast %30 : vector<1x8xi1> to vector<1x8xi1>
    %60 = vector.broadcast %59 : vector<1x8xi1> to vector<16x8xi1>
    %61 = vector.broadcast %cst_32 : f32 to vector<16x8xf32>
    %62 = arith.select %60, %61, %36 : vector<16x8xi1>, vector<16x8xf32>
    %cst_33 = arith.constant dense<0xFF800000> : vector<16xf32>
    %63 = vector.multi_reduction <maximumf>, %62, %cst_33 [1] : vector<16x8xf32> to vector<16xf32>
    %64 = vector.shape_cast %63 : vector<16xf32> to vector<16x1xf32>
    %65 = vector.broadcast %64 : vector<16x1xf32> to vector<16x8xf32>
    %66 = arith.subf %62, %65 : vector<16x8xf32>
    %67 = math.exp %66 : vector<16x8xf32>
    %cst_34 = arith.constant dense<0.000000e+00> : vector<16xf32>
    %68 = vector.multi_reduction <add>, %67, %cst_34 [1] : vector<16x8xf32> to vector<16xf32>
    %69 = vector.shape_cast %68 : vector<16xf32> to vector<16x1xf32>
    %70 = tpu.reciprocal %69 {approx = true} : vector<16x1xf32> -> vector<16x1xf32>
    %71 = arith.mulf %69, %70 : vector<16x1xf32>
    %cst_35 = arith.constant 2.000000e+00 : f32
    %72 = vector.broadcast %cst_35 : f32 to vector<16x1xf32>
    %73 = arith.subf %72, %71 : vector<16x1xf32>
    %74 = arith.mulf %70, %73 : vector<16x1xf32>
    %75 = vector.broadcast %74 : vector<16x1xf32> to vector<16x8xf32>
    %76 = arith.mulf %67, %75 : vector<16x8xf32>
    %cst_36 = arith.constant 0.000000e+00 : f32
    %77 = vector.shape_cast %24 : vector<16x1xi1> to vector<16x1xi1>
    %78 = vector.broadcast %77 : vector<16x1xi1> to vector<16x8xi1>
    %79 = vector.broadcast %cst_36 : f32 to vector<16x8xf32>
    %80 = arith.select %78, %79, %76 : vector<16x8xi1>, vector<16x8xf32>
    %c0_37 = arith.constant 0 : index
    %c0_38 = arith.constant 0 : index
    %c0_39 = arith.constant 0 : index
    %81 = vector.load %arg7[%c0_37, %c0_38, %c0_39] : memref<2x8x16xf32, #tpu.memory_space<vmem>>, vector<1x8x16xf32>
    %82 = vector.shape_cast %81 : vector<1x8x16xf32> to vector<8x16xf32>
    %cst_40 = arith.constant 0.176776692 : f32
    %83 = vector.broadcast %cst_40 : f32 to vector<8x16xf32>
    %84 = arith.mulf %82, %83 : vector<8x16xf32>
    %cst_41 = arith.constant -1.000000e+30 : f32
    %85 = vector.shape_cast %27 : vector<1x16xi1> to vector<1x16xi1>
    %86 = vector.broadcast %85 : vector<1x16xi1> to vector<8x16xi1>
    %87 = vector.broadcast %cst_41 : f32 to vector<8x16xf32>
    %88 = arith.select %86, %87, %84 : vector<8x16xi1>, vector<8x16xf32>
    %cst_42 = arith.constant dense<0xFF800000> : vector<8xf32>
    %89 = vector.multi_reduction <maximumf>, %88, %cst_42 [1] : vector<8x16xf32> to vector<8xf32>
    %90 = vector.shape_cast %89 : vector<8xf32> to vector<8x1xf32>
    %91 = vector.broadcast %90 : vector<8x1xf32> to vector<8x16xf32>
    %92 = arith.subf %88, %91 : vector<8x16xf32>
    %93 = math.exp %92 : vector<8x16xf32>
    %cst_43 = arith.constant dense<0.000000e+00> : vector<8xf32>
    %94 = vector.multi_reduction <add>, %93, %cst_43 [1] : vector<8x16xf32> to vector<8xf32>
    %95 = vector.shape_cast %94 : vector<8xf32> to vector<8x1xf32>
    %96 = tpu.reciprocal %95 {approx = true} : vector<8x1xf32> -> vector<8x1xf32>
    %97 = arith.mulf %95, %96 : vector<8x1xf32>
    %cst_44 = arith.constant 2.000000e+00 : f32
    %98 = vector.broadcast %cst_44 : f32 to vector<8x1xf32>
    %99 = arith.subf %98, %97 : vector<8x1xf32>
    %100 = arith.mulf %96, %99 : vector<8x1xf32>
    %101 = vector.broadcast %100 : vector<8x1xf32> to vector<8x16xf32>
    %102 = arith.mulf %93, %101 : vector<8x16xf32>
    %cst_45 = arith.constant 0.000000e+00 : f32
    %103 = vector.shape_cast %20 : vector<8x1xi1> to vector<8x1xi1>
    %104 = vector.broadcast %103 : vector<8x1xi1> to vector<8x16xi1>
    %105 = vector.broadcast %cst_45 : f32 to vector<8x16xf32>
    %106 = arith.select %104, %105, %102 : vector<8x16xi1>, vector<8x16xf32>
    %c0_46 = arith.constant 0 : index
    %c0_47 = arith.constant 0 : index
    %c0_48 = arith.constant 0 : index
    %107 = vector.load %arg8[%c0_46, %c0_47, %c0_48] : memref<2x16x8xf32, #tpu.memory_space<vmem>>, vector<1x16x8xf32>
    %108 = vector.shape_cast %107 : vector<1x16x8xf32> to vector<16x8xf32>
    %cst_49 = arith.constant 0.176776692 : f32
    %109 = vector.broadcast %cst_49 : f32 to vector<16x8xf32>
    %110 = arith.mulf %108, %109 : vector<16x8xf32>
    %cst_50 = arith.constant -1.000000e+30 : f32
    %111 = vector.shape_cast %30 : vector<1x8xi1> to vector<1x8xi1>
    %112 = vector.broadcast %111 : vector<1x8xi1> to vector<16x8xi1>
    %113 = vector.broadcast %cst_50 : f32 to vector<16x8xf32>
    %114 = arith.select %112, %113, %110 : vector<16x8xi1>, vector<16x8xf32>
    %cst_51 = arith.constant dense<0xFF800000> : vector<16xf32>
    %115 = vector.multi_reduction <maximumf>, %114, %cst_51 [1] : vector<16x8xf32> to vector<16xf32>
    %116 = vector.shape_cast %115 : vector<16xf32> to vector<16x1xf32>
    %117 = vector.broadcast %116 : vector<16x1xf32> to vector<16x8xf32>
    %118 = arith.subf %114, %117 : vector<16x8xf32>
    %119 = math.exp %118 : vector<16x8xf32>
    %cst_52 = arith.constant dense<0.000000e+00> : vector<16xf32>
    %120 = vector.multi_reduction <add>, %119, %cst_52 [1] : vector<16x8xf32> to vector<16xf32>
    %121 = vector.shape_cast %120 : vector<16xf32> to vector<16x1xf32>
    %122 = tpu.reciprocal %121 {approx = true} : vector<16x1xf32> -> vector<16x1xf32>
    %123 = arith.mulf %121, %122 : vector<16x1xf32>
    %cst_53 = arith.constant 2.000000e+00 : f32
    %124 = vector.broadcast %cst_53 : f32 to vector<16x1xf32>
    %125 = arith.subf %124, %123 : vector<16x1xf32>
    %126 = arith.mulf %122, %125 : vector<16x1xf32>
    %127 = vector.broadcast %126 : vector<16x1xf32> to vector<16x8xf32>
    %128 = arith.mulf %119, %127 : vector<16x8xf32>
    %cst_54 = arith.constant 0.000000e+00 : f32
    %129 = vector.shape_cast %24 : vector<16x1xi1> to vector<16x1xi1>
    %130 = vector.broadcast %129 : vector<16x1xi1> to vector<16x8xi1>
    %131 = vector.broadcast %cst_54 : f32 to vector<16x8xf32>
    %132 = arith.select %130, %131, %128 : vector<16x8xi1>, vector<16x8xf32>
    %133 = tpu.concatenate %58, %106 in 0 : vector<8x16xf32>, vector<8x16xf32> -> vector<16x16xf32>
    %cst_55 = arith.constant dense<0.000000e+00> : vector<16x32xf32>
    %134 = tpu.matmul %133, %16, %cst_55 {dimension_numbers = #tpu.dot_dimension_numbers<[1], [0], [0], [1], [0, 0, 1, 1], [], []>} : vector<16x16xf32>, vector<16x32xf32>, vector<16x32xf32> -> vector<16x32xf32>
    %135 = tpu.concatenate %80, %132 in 0 : vector<16x8xf32>, vector<16x8xf32> -> vector<32x8xf32>
    %cst_56 = arith.constant dense<0.000000e+00> : vector<32x32xf32>
    %136 = tpu.matmul %135, %15, %cst_56 {dimension_numbers = #tpu.dot_dimension_numbers<[1], [0], [0], [1], [0, 0, 1, 1], [], []>} : vector<32x8xf32>, vector<8x32xf32>, vector<32x32xf32> -> vector<32x32xf32>
    %137 = vector.extract_strided_slice %134 {offsets = [0, 0], sizes = [8, 32], strides = [1, 1]} : vector<16x32xf32> to vector<8x32xf32>
    %138 = arith.addf %137, %11 : vector<8x32xf32>
    %cst_57 = arith.constant dense<0.000000e+00> : vector<8xf32>
    %139 = vector.multi_reduction <add>, %138, %cst_57 [1] : vector<8x32xf32> to vector<8xf32>
    %140 = vector.shape_cast %139 : vector<8xf32> to vector<8x1xf32>
    %cst_58 = arith.constant 3.200000e+01 : f32
    %141 = vector.broadcast %cst_58 : f32 to vector<8x1xf32>
    %142 = arith.divf %140, %141 : vector<8x1xf32>
    %143 = vector.broadcast %142 : vector<8x1xf32> to vector<8x32xf32>
    %144 = arith.subf %138, %143 : vector<8x32xf32>
    %145 = arith.mulf %144, %144 : vector<8x32xf32>
    %cst_59 = arith.constant dense<0.000000e+00> : vector<8xf32>
    %146 = vector.multi_reduction <add>, %145, %cst_59 [1] : vector<8x32xf32> to vector<8xf32>
    %147 = vector.shape_cast %146 : vector<8xf32> to vector<8x1xf32>
    %cst_60 = arith.constant 3.200000e+01 : f32
    %148 = vector.broadcast %cst_60 : f32 to vector<8x1xf32>
    %149 = arith.divf %147, %148 : vector<8x1xf32>
    %150 = vector.broadcast %142 : vector<8x1xf32> to vector<8x32xf32>
    %151 = arith.subf %138, %150 : vector<8x32xf32>
    %cst_61 = arith.constant 9.99999974E-6 : f32
    %152 = vector.broadcast %cst_61 : f32 to vector<8x1xf32>
    %153 = arith.addf %149, %152 : vector<8x1xf32>
    %154 = math.rsqrt %153 : vector<8x1xf32>
    %155 = vector.broadcast %154 : vector<8x1xf32> to vector<8x32xf32>
    %156 = arith.mulf %151, %155 : vector<8x32xf32>
    %157 = vector.extract_strided_slice %134 {offsets = [8, 0], sizes = [8, 32], strides = [1, 1]} : vector<16x32xf32> to vector<8x32xf32>
    %158 = arith.addf %157, %11 : vector<8x32xf32>
    %cst_62 = arith.constant dense<0.000000e+00> : vector<8xf32>
    %159 = vector.multi_reduction <add>, %158, %cst_62 [1] : vector<8x32xf32> to vector<8xf32>
    %160 = vector.shape_cast %159 : vector<8xf32> to vector<8x1xf32>
    %cst_63 = arith.constant 3.200000e+01 : f32
    %161 = vector.broadcast %cst_63 : f32 to vector<8x1xf32>
    %162 = arith.divf %160, %161 : vector<8x1xf32>
    %163 = vector.broadcast %162 : vector<8x1xf32> to vector<8x32xf32>
    %164 = arith.subf %158, %163 : vector<8x32xf32>
    %165 = arith.mulf %164, %164 : vector<8x32xf32>
    %cst_64 = arith.constant dense<0.000000e+00> : vector<8xf32>
    %166 = vector.multi_reduction <add>, %165, %cst_64 [1] : vector<8x32xf32> to vector<8xf32>
    %167 = vector.shape_cast %166 : vector<8xf32> to vector<8x1xf32>
    %cst_65 = arith.constant 3.200000e+01 : f32
    %168 = vector.broadcast %cst_65 : f32 to vector<8x1xf32>
    %169 = arith.divf %167, %168 : vector<8x1xf32>
    %170 = vector.broadcast %162 : vector<8x1xf32> to vector<8x32xf32>
    %171 = arith.subf %158, %170 : vector<8x32xf32>
    %cst_66 = arith.constant 9.99999974E-6 : f32
    %172 = vector.broadcast %cst_66 : f32 to vector<8x1xf32>
    %173 = arith.addf %169, %172 : vector<8x1xf32>
    %174 = math.rsqrt %173 : vector<8x1xf32>
    %175 = vector.broadcast %174 : vector<8x1xf32> to vector<8x32xf32>
    %176 = arith.mulf %171, %175 : vector<8x32xf32>
    %177 = tpu.concatenate %156, %176 in 1 : vector<8x32xf32>, vector<8x32xf32> -> vector<8x64xf32>
    %c0_67 = arith.constant 0 : index
    %c0_68 = arith.constant 0 : index
    %c0_69 = arith.constant 0 : index
    %178 = vector.load %arg9[%c0_67, %c0_68, %c0_69] : memref<2x8x64xf32, #tpu.memory_space<vmem>>, vector<1x8x64xf32>
    %179 = vector.shape_cast %178 : vector<1x8x64xf32> to vector<8x64xf32>
    %180 = vector.shape_cast %177 : vector<8x64xf32> to vector<1x8x64xf32>
    tpu.vector_store %arg9[%c0_67, %c0_68, %c0_69], %180 {strides = array<i32>} : memref<2x8x64xf32, #tpu.memory_space<vmem>>, vector<1x8x64xf32>,
    %181 = vector.extract_strided_slice %136 {offsets = [0, 0], sizes = [16, 32], strides = [1, 1]} : vector<32x32xf32> to vector<16x32xf32>
    %182 = arith.addf %181, %12 : vector<16x32xf32>
    %cst_70 = arith.constant dense<0.000000e+00> : vector<16xf32>
    %183 = vector.multi_reduction <add>, %182, %cst_70 [1] : vector<16x32xf32> to vector<16xf32>
    %184 = vector.shape_cast %183 : vector<16xf32> to vector<16x1xf32>
    %cst_71 = arith.constant 3.200000e+01 : f32
    %185 = vector.broadcast %cst_71 : f32 to vector<16x1xf32>
    %186 = arith.divf %184, %185 : vector<16x1xf32>
    %187 = vector.broadcast %186 : vector<16x1xf32> to vector<16x32xf32>
    %188 = arith.subf %182, %187 : vector<16x32xf32>
    %189 = arith.mulf %188, %188 : vector<16x32xf32>
    %cst_72 = arith.constant dense<0.000000e+00> : vector<16xf32>
    %190 = vector.multi_reduction <add>, %189, %cst_72 [1] : vector<16x32xf32> to vector<16xf32>
    %191 = vector.shape_cast %190 : vector<16xf32> to vector<16x1xf32>
    %cst_73 = arith.constant 3.200000e+01 : f32
    %192 = vector.broadcast %cst_73 : f32 to vector<16x1xf32>
    %193 = arith.divf %191, %192 : vector<16x1xf32>
    %194 = vector.broadcast %186 : vector<16x1xf32> to vector<16x32xf32>
    %195 = arith.subf %182, %194 : vector<16x32xf32>
    %cst_74 = arith.constant 9.99999974E-6 : f32
    %196 = vector.broadcast %cst_74 : f32 to vector<16x1xf32>
    %197 = arith.addf %193, %196 : vector<16x1xf32>
    %198 = math.rsqrt %197 : vector<16x1xf32>
    %199 = vector.broadcast %198 : vector<16x1xf32> to vector<16x32xf32>
    %200 = arith.mulf %195, %199 : vector<16x32xf32>
    %201 = vector.extract_strided_slice %136 {offsets = [16, 0], sizes = [16, 32], strides = [1, 1]} : vector<32x32xf32> to vector<16x32xf32>
    %202 = arith.addf %201, %12 : vector<16x32xf32>
    %cst_75 = arith.constant dense<0.000000e+00> : vector<16xf32>
    %203 = vector.multi_reduction <add>, %202, %cst_75 [1] : vector<16x32xf32> to vector<16xf32>
    %204 = vector.shape_cast %203 : vector<16xf32> to vector<16x1xf32>
    %cst_76 = arith.constant 3.200000e+01 : f32
    %205 = vector.broadcast %cst_76 : f32 to vector<16x1xf32>
    %206 = arith.divf %204, %205 : vector<16x1xf32>
    %207 = vector.broadcast %206 : vector<16x1xf32> to vector<16x32xf32>
    %208 = arith.subf %202, %207 : vector<16x32xf32>
    %209 = arith.mulf %208, %208 : vector<16x32xf32>
    %cst_77 = arith.constant dense<0.000000e+00> : vector<16xf32>
    %210 = vector.multi_reduction <add>, %209, %cst_77 [1] : vector<16x32xf32> to vector<16xf32>
    %211 = vector.shape_cast %210 : vector<16xf32> to vector<16x1xf32>
    %cst_78 = arith.constant 3.200000e+01 : f32
    %212 = vector.broadcast %cst_78 : f32 to vector<16x1xf32>
    %213 = arith.divf %211, %212 : vector<16x1xf32>
    %214 = vector.broadcast %206 : vector<16x1xf32> to vector<16x32xf32>
    %215 = arith.subf %202, %214 : vector<16x32xf32>
    %cst_79 = arith.constant 9.99999974E-6 : f32
    %216 = vector.broadcast %cst_79 : f32 to vector<16x1xf32>
    %217 = arith.addf %213, %216 : vector<16x1xf32>
    %218 = math.rsqrt %217 : vector<16x1xf32>
    %219 = vector.broadcast %218 : vector<16x1xf32> to vector<16x32xf32>
    %220 = arith.mulf %215, %219 : vector<16x32xf32>
    %221 = tpu.concatenate %200, %220 in 1 : vector<16x32xf32>, vector<16x32xf32> -> vector<16x64xf32>
    %c0_80 = arith.constant 0 : index
    %c0_81 = arith.constant 0 : index
    %c0_82 = arith.constant 0 : index
    %222 = vector.load %arg10[%c0_80, %c0_81, %c0_82] : memref<2x16x64xf32, #tpu.memory_space<vmem>>, vector<1x16x64xf32>
    %223 = vector.shape_cast %222 : vector<1x16x64xf32> to vector<16x64xf32>
    %224 = vector.shape_cast %221 : vector<16x64xf32> to vector<1x16x64xf32>
    tpu.vector_store %arg10[%c0_80, %c0_81, %c0_82], %224 {strides = array<i32>} : memref<2x16x64xf32, #tpu.memory_space<vmem>>, vector<1x16x64xf32>,
    %225 = vector.extract_strided_slice %0 {offsets = [8, 0], sizes = [8, 32], strides = [1, 1]} : vector<16x32xf32> to vector<8x32xf32>
    %226 = vector.extract_strided_slice %1 {offsets = [16, 0], sizes = [16, 32], strides = [1, 1]} : vector<32x32xf32> to vector<16x32xf32>
    %227 = vector.extract_strided_slice %3 {offsets = [8, 0], sizes = [8, 32], strides = [1, 1]} : vector<16x32xf32> to vector<8x32xf32>
    %228 = vector.extract_strided_slice %5 {offsets = [16, 0], sizes = [16, 32], strides = [1, 1]} : vector<32x32xf32> to vector<16x32xf32>
    %229 = vector.extract_strided_slice %7 {offsets = [8, 0], sizes = [8, 32], strides = [1, 1]} : vector<16x32xf32> to vector<8x32xf32>
    %230 = vector.extract_strided_slice %9 {offsets = [16, 0], sizes = [16, 32], strides = [1, 1]} : vector<32x32xf32> to vector<16x32xf32>
    %cst_83 = arith.constant dense<0.000000e+00> : vector<8xf32>
    %231 = vector.multi_reduction <add>, %225, %cst_83 [1] : vector<8x32xf32> to vector<8xf32>
    %232 = vector.shape_cast %231 : vector<8xf32> to vector<8x1xf32>
    %cst_84 = arith.constant 0.000000e+00 : f32
    %233 = vector.broadcast %cst_84 : f32 to vector<8x1xf32>
    %234 = arith.cmpf oeq, %232, %233 : vector<8x1xf32>
    %cst_85 = arith.constant dense<0.000000e+00> : vector<16xf32>
    %235 = vector.multi_reduction <add>, %226, %cst_85 [1] : vector<16x32xf32> to vector<16xf32>
    %236 = vector.shape_cast %235 : vector<16xf32> to vector<16x1xf32>
    %cst_86 = arith.constant 0.000000e+00 : f32
    %237 = vector.broadcast %cst_86 : f32 to vector<16x1xf32>
    %238 = arith.cmpf oeq, %236, %237 : vector<16x1xf32>
    %cst_87 = arith.constant dense<0.000000e+00> : vector<1x16xf32>
    %239 = tpu.matmul %10, %226, %cst_87 {dimension_numbers = #tpu.dot_dimension_numbers<[1], [1], [0], [0], [0, 0, 1, 0], [], []>} : vector<1x32xf32>, vector<16x32xf32>, vector<1x16xf32> -> vector<1x16xf32>
    %cst_88 = arith.constant 0.000000e+00 : f32
    %240 = vector.broadcast %cst_88 : f32 to vector<1x16xf32>
    %241 = arith.cmpf oeq, %239, %240 : vector<1x16xf32>
    %cst_89 = arith.constant dense<0.000000e+00> : vector<1x8xf32>
    %242 = tpu.matmul %10, %225, %cst_89 {dimension_numbers = #tpu.dot_dimension_numbers<[1], [1], [0], [0], [0, 0, 1, 0], [], []>} : vector<1x32xf32>, vector<8x32xf32>, vector<1x8xf32> -> vector<1x8xf32>
    %cst_90 = arith.constant 0.000000e+00 : f32
    %243 = vector.broadcast %cst_90 : f32 to vector<1x8xf32>
    %244 = arith.cmpf oeq, %242, %243 : vector<1x8xf32>
    %cst_91 = arith.constant dense<0.000000e+00> : vector<8x16xf32>
    %245 = tpu.matmul %227, %228, %cst_91 {dimension_numbers = #tpu.dot_dimension_numbers<[1], [1], [0], [0], [0, 0, 1, 0], [], []>} : vector<8x32xf32>, vector<16x32xf32>, vector<8x16xf32> -> vector<8x16xf32>
    %cst_92 = arith.constant 0.176776692 : f32
    %246 = vector.broadcast %cst_92 : f32 to vector<8x16xf32>
    %247 = arith.mulf %245, %246 : vector<8x16xf32>
    %cst_93 = arith.constant dense<0.000000e+00> : vector<16x8xf32>
    %248 = tpu.matmul %228, %227, %cst_93 {dimension_numbers = #tpu.dot_dimension_numbers<[1], [1], [0], [0], [0, 0, 1, 0], [], []>} : vector<16x32xf32>, vector<8x32xf32>, vector<16x8xf32> -> vector<16x8xf32>
    %cst_94 = arith.constant 0.176776692 : f32
    %249 = vector.broadcast %cst_94 : f32 to vector<16x8xf32>
    %250 = arith.mulf %248, %249 : vector<16x8xf32>
    %cst_95 = arith.constant -1.000000e+30 : f32
    %251 = vector.shape_cast %241 : vector<1x16xi1> to vector<1x16xi1>
    %252 = vector.broadcast %251 : vector<1x16xi1> to vector<8x16xi1>
    %253 = vector.broadcast %cst_95 : f32 to vector<8x16xf32>
    %254 = arith.select %252, %253, %247 : vector<8x16xi1>, vector<8x16xf32>
    %cst_96 = arith.constant dense<0xFF800000> : vector<8xf32>
    %255 = vector.multi_reduction <maximumf>, %254, %cst_96 [1] : vector<8x16xf32> to vector<8xf32>
    %256 = vector.shape_cast %255 : vector<8xf32> to vector<8x1xf32>
    %257 = vector.broadcast %256 : vector<8x1xf32> to vector<8x16xf32>
    %258 = arith.subf %254, %257 : vector<8x16xf32>
    %259 = math.exp %258 : vector<8x16xf32>
    %cst_97 = arith.constant dense<0.000000e+00> : vector<8xf32>
    %260 = vector.multi_reduction <add>, %259, %cst_97 [1] : vector<8x16xf32> to vector<8xf32>
    %261 = vector.shape_cast %260 : vector<8xf32> to vector<8x1xf32>
    %262 = tpu.reciprocal %261 {approx = true} : vector<8x1xf32> -> vector<8x1xf32>
    %263 = arith.mulf %261, %262 : vector<8x1xf32>
    %cst_98 = arith.constant 2.000000e+00 : f32
    %264 = vector.broadcast %cst_98 : f32 to vector<8x1xf32>
    %265 = arith.subf %264, %263 : vector<8x1xf32>
    %266 = arith.mulf %262, %265 : vector<8x1xf32>
    %267 = vector.broadcast %266 : vector<8x1xf32> to vector<8x16xf32>
    %268 = arith.mulf %259, %267 : vector<8x16xf32>
    %cst_99 = arith.constant 0.000000e+00 : f32
    %269 = vector.shape_cast %234 : vector<8x1xi1> to vector<8x1xi1>
    %270 = vector.broadcast %269 : vector<8x1xi1> to vector<8x16xi1>
    %271 = vector.broadcast %cst_99 : f32 to vector<8x16xf32>
    %272 = arith.select %270, %271, %268 : vector<8x16xi1>, vector<8x16xf32>
    %cst_100 = arith.constant -1.000000e+30 : f32
    %273 = vector.shape_cast %244 : vector<1x8xi1> to vector<1x8xi1>
    %274 = vector.broadcast %273 : vector<1x8xi1> to vector<16x8xi1>
    %275 = vector.broadcast %cst_100 : f32 to vector<16x8xf32>
    %276 = arith.select %274, %275, %250 : vector<16x8xi1>, vector<16x8xf32>
    %cst_101 = arith.constant dense<0xFF800000> : vector<16xf32>
    %277 = vector.multi_reduction <maximumf>, %276, %cst_101 [1] : vector<16x8xf32> to vector<16xf32>
    %278 = vector.shape_cast %277 : vector<16xf32> to vector<16x1xf32>
    %279 = vector.broadcast %278 : vector<16x1xf32> to vector<16x8xf32>
    %280 = arith.subf %276, %279 : vector<16x8xf32>
    %281 = math.exp %280 : vector<16x8xf32>
    %cst_102 = arith.constant dense<0.000000e+00> : vector<16xf32>
    %282 = vector.multi_reduction <add>, %281, %cst_102 [1] : vector<16x8xf32> to vector<16xf32>
    %283 = vector.shape_cast %282 : vector<16xf32> to vector<16x1xf32>
    %284 = tpu.reciprocal %283 {approx = true} : vector<16x1xf32> -> vector<16x1xf32>
    %285 = arith.mulf %283, %284 : vector<16x1xf32>
    %cst_103 = arith.constant 2.000000e+00 : f32
    %286 = vector.broadcast %cst_103 : f32 to vector<16x1xf32>
    %287 = arith.subf %286, %285 : vector<16x1xf32>
    %288 = arith.mulf %284, %287 : vector<16x1xf32>
    %289 = vector.broadcast %288 : vector<16x1xf32> to vector<16x8xf32>
    %290 = arith.mulf %281, %289 : vector<16x8xf32>
    %cst_104 = arith.constant 0.000000e+00 : f32
    %291 = vector.shape_cast %238 : vector<16x1xi1> to vector<16x1xi1>
    %292 = vector.broadcast %291 : vector<16x1xi1> to vector<16x8xi1>
    %293 = vector.broadcast %cst_104 : f32 to vector<16x8xf32>
    %294 = arith.select %292, %293, %290 : vector<16x8xi1>, vector<16x8xf32>
    %c1 = arith.constant 1 : index
    %c0_105 = arith.constant 0 : index
    %c0_106 = arith.constant 0 : index
    %295 = vector.load %arg7[%c1, %c0_105, %c0_106] : memref<2x8x16xf32, #tpu.memory_space<vmem>>, vector<1x8x16xf32>
    %296 = vector.shape_cast %295 : vector<1x8x16xf32> to vector<8x16xf32>
    %cst_107 = arith.constant 0.176776692 : f32
    %297 = vector.broadcast %cst_107 : f32 to vector<8x16xf32>
    %298 = arith.mulf %296, %297 : vector<8x16xf32>
    %cst_108 = arith.constant -1.000000e+30 : f32
    %299 = vector.shape_cast %241 : vector<1x16xi1> to vector<1x16xi1>
    %300 = vector.broadcast %299 : vector<1x16xi1> to vector<8x16xi1>
    %301 = vector.broadcast %cst_108 : f32 to vector<8x16xf32>
    %302 = arith.select %300, %301, %298 : vector<8x16xi1>, vector<8x16xf32>
    %cst_109 = arith.constant dense<0xFF800000> : vector<8xf32>
    %303 = vector.multi_reduction <maximumf>, %302, %cst_109 [1] : vector<8x16xf32> to vector<8xf32>
    %304 = vector.shape_cast %303 : vector<8xf32> to vector<8x1xf32>
    %305 = vector.broadcast %304 : vector<8x1xf32> to vector<8x16xf32>
    %306 = arith.subf %302, %305 : vector<8x16xf32>
    %307 = math.exp %306 : vector<8x16xf32>
    %cst_110 = arith.constant dense<0.000000e+00> : vector<8xf32>
    %308 = vector.multi_reduction <add>, %307, %cst_110 [1] : vector<8x16xf32> to vector<8xf32>
    %309 = vector.shape_cast %308 : vector<8xf32> to vector<8x1xf32>
    %310 = tpu.reciprocal %309 {approx = true} : vector<8x1xf32> -> vector<8x1xf32>
    %311 = arith.mulf %309, %310 : vector<8x1xf32>
    %cst_111 = arith.constant 2.000000e+00 : f32
    %312 = vector.broadcast %cst_111 : f32 to vector<8x1xf32>
    %313 = arith.subf %312, %311 : vector<8x1xf32>
    %314 = arith.mulf %310, %313 : vector<8x1xf32>
    %315 = vector.broadcast %314 : vector<8x1xf32> to vector<8x16xf32>
    %316 = arith.mulf %307, %315 : vector<8x16xf32>
    %cst_112 = arith.constant 0.000000e+00 : f32
    %317 = vector.shape_cast %234 : vector<8x1xi1> to vector<8x1xi1>
    %318 = vector.broadcast %317 : vector<8x1xi1> to vector<8x16xi1>
    %319 = vector.broadcast %cst_112 : f32 to vector<8x16xf32>
    %320 = arith.select %318, %319, %316 : vector<8x16xi1>, vector<8x16xf32>
    %c1_113 = arith.constant 1 : index
    %c0_114 = arith.constant 0 : index
    %c0_115 = arith.constant 0 : index
    %321 = vector.load %arg8[%c1_113, %c0_114, %c0_115] : memref<2x16x8xf32, #tpu.memory_space<vmem>>, vector<1x16x8xf32>
    %322 = vector.shape_cast %321 : vector<1x16x8xf32> to vector<16x8xf32>
    %cst_116 = arith.constant 0.176776692 : f32
    %323 = vector.broadcast %cst_116 : f32 to vector<16x8xf32>
    %324 = arith.mulf %322, %323 : vector<16x8xf32>
    %cst_117 = arith.constant -1.000000e+30 : f32
    %325 = vector.shape_cast %244 : vector<1x8xi1> to vector<1x8xi1>
    %326 = vector.broadcast %325 : vector<1x8xi1> to vector<16x8xi1>
    %327 = vector.broadcast %cst_117 : f32 to vector<16x8xf32>
    %328 = arith.select %326, %327, %324 : vector<16x8xi1>, vector<16x8xf32>
    %cst_118 = arith.constant dense<0xFF800000> : vector<16xf32>
    %329 = vector.multi_reduction <maximumf>, %328, %cst_118 [1] : vector<16x8xf32> to vector<16xf32>
    %330 = vector.shape_cast %329 : vector<16xf32> to vector<16x1xf32>
    %331 = vector.broadcast %330 : vector<16x1xf32> to vector<16x8xf32>
    %332 = arith.subf %328, %331 : vector<16x8xf32>
    %333 = math.exp %332 : vector<16x8xf32>
    %cst_119 = arith.constant dense<0.000000e+00> : vector<16xf32>
    %334 = vector.multi_reduction <add>, %333, %cst_119 [1] : vector<16x8xf32> to vector<16xf32>
    %335 = vector.shape_cast %334 : vector<16xf32> to vector<16x1xf32>
    %336 = tpu.reciprocal %335 {approx = true} : vector<16x1xf32> -> vector<16x1xf32>
    %337 = arith.mulf %335, %336 : vector<16x1xf32>
    %cst_120 = arith.constant 2.000000e+00 : f32
    %338 = vector.broadcast %cst_120 : f32 to vector<16x1xf32>
    %339 = arith.subf %338, %337 : vector<16x1xf32>
    %340 = arith.mulf %336, %339 : vector<16x1xf32>
    %341 = vector.broadcast %340 : vector<16x1xf32> to vector<16x8xf32>
    %342 = arith.mulf %333, %341 : vector<16x8xf32>
    %cst_121 = arith.constant 0.000000e+00 : f32
    %343 = vector.shape_cast %238 : vector<16x1xi1> to vector<16x1xi1>
    %344 = vector.broadcast %343 : vector<16x1xi1> to vector<16x8xi1>
    %345 = vector.broadcast %cst_121 : f32 to vector<16x8xf32>
    %346 = arith.select %344, %345, %342 : vector<16x8xi1>, vector<16x8xf32>
    %347 = tpu.concatenate %272, %320 in 0 : vector<8x16xf32>, vector<8x16xf32> -> vector<16x16xf32>
    %cst_122 = arith.constant dense<0.000000e+00> : vector<16x32xf32>
    %348 = tpu.matmul %347, %230, %cst_122 {dimension_numbers = #tpu.dot_dimension_numbers<[1], [0], [0], [1], [0, 0, 1, 1], [], []>} : vector<16x16xf32>, vector<16x32xf32>, vector<16x32xf32> -> vector<16x32xf32>
    %349 = tpu.concatenate %294, %346 in 0 : vector<16x8xf32>, vector<16x8xf32> -> vector<32x8xf32>
    %cst_123 = arith.constant dense<0.000000e+00> : vector<32x32xf32>
    %350 = tpu.matmul %349, %229, %cst_123 {dimension_numbers = #tpu.dot_dimension_numbers<[1], [0], [0], [1], [0, 0, 1, 1], [], []>} : vector<32x8xf32>, vector<8x32xf32>, vector<32x32xf32> -> vector<32x32xf32>
    %351 = vector.extract_strided_slice %348 {offsets = [0, 0], sizes = [8, 32], strides = [1, 1]} : vector<16x32xf32> to vector<8x32xf32>
    %352 = arith.addf %351, %225 : vector<8x32xf32>
    %cst_124 = arith.constant dense<0.000000e+00> : vector<8xf32>
    %353 = vector.multi_reduction <add>, %352, %cst_124 [1] : vector<8x32xf32> to vector<8xf32>
    %354 = vector.shape_cast %353 : vector<8xf32> to vector<8x1xf32>
    %cst_125 = arith.constant 3.200000e+01 : f32
    %355 = vector.broadcast %cst_125 : f32 to vector<8x1xf32>
    %356 = arith.divf %354, %355 : vector<8x1xf32>
    %357 = vector.broadcast %356 : vector<8x1xf32> to vector<8x32xf32>
    %358 = arith.subf %352, %357 : vector<8x32xf32>
    %359 = arith.mulf %358, %358 : vector<8x32xf32>
    %cst_126 = arith.constant dense<0.000000e+00> : vector<8xf32>
    %360 = vector.multi_reduction <add>, %359, %cst_126 [1] : vector<8x32xf32> to vector<8xf32>
    %361 = vector.shape_cast %360 : vector<8xf32> to vector<8x1xf32>
    %cst_127 = arith.constant 3.200000e+01 : f32
    %362 = vector.broadcast %cst_127 : f32 to vector<8x1xf32>
    %363 = arith.divf %361, %362 : vector<8x1xf32>
    %364 = vector.broadcast %356 : vector<8x1xf32> to vector<8x32xf32>
    %365 = arith.subf %352, %364 : vector<8x32xf32>
    %cst_128 = arith.constant 9.99999974E-6 : f32
    %366 = vector.broadcast %cst_128 : f32 to vector<8x1xf32>
    %367 = arith.addf %363, %366 : vector<8x1xf32>
    %368 = math.rsqrt %367 : vector<8x1xf32>
    %369 = vector.broadcast %368 : vector<8x1xf32> to vector<8x32xf32>
    %370 = arith.mulf %365, %369 : vector<8x32xf32>
    %371 = vector.extract_strided_slice %348 {offsets = [8, 0], sizes = [8, 32], strides = [1, 1]} : vector<16x32xf32> to vector<8x32xf32>
    %372 = arith.addf %371, %225 : vector<8x32xf32>
    %cst_129 = arith.constant dense<0.000000e+00> : vector<8xf32>
    %373 = vector.multi_reduction <add>, %372, %cst_129 [1] : vector<8x32xf32> to vector<8xf32>
    %374 = vector.shape_cast %373 : vector<8xf32> to vector<8x1xf32>
    %cst_130 = arith.constant 3.200000e+01 : f32
    %375 = vector.broadcast %cst_130 : f32 to vector<8x1xf32>
    %376 = arith.divf %374, %375 : vector<8x1xf32>
    %377 = vector.broadcast %376 : vector<8x1xf32> to vector<8x32xf32>
    %378 = arith.subf %372, %377 : vector<8x32xf32>
    %379 = arith.mulf %378, %378 : vector<8x32xf32>
    %cst_131 = arith.constant dense<0.000000e+00> : vector<8xf32>
    %380 = vector.multi_reduction <add>, %379, %cst_131 [1] : vector<8x32xf32> to vector<8xf32>
    %381 = vector.shape_cast %380 : vector<8xf32> to vector<8x1xf32>
    %cst_132 = arith.constant 3.200000e+01 : f32
    %382 = vector.broadcast %cst_132 : f32 to vector<8x1xf32>
    %383 = arith.divf %381, %382 : vector<8x1xf32>
    %384 = vector.broadcast %376 : vector<8x1xf32> to vector<8x32xf32>
    %385 = arith.subf %372, %384 : vector<8x32xf32>
    %cst_133 = arith.constant 9.99999974E-6 : f32
    %386 = vector.broadcast %cst_133 : f32 to vector<8x1xf32>
    %387 = arith.addf %383, %386 : vector<8x1xf32>
    %388 = math.rsqrt %387 : vector<8x1xf32>
    %389 = vector.broadcast %388 : vector<8x1xf32> to vector<8x32xf32>
    %390 = arith.mulf %385, %389 : vector<8x32xf32>
    %391 = tpu.concatenate %370, %390 in 1 : vector<8x32xf32>, vector<8x32xf32> -> vector<8x64xf32>
    %c1_134 = arith.constant 1 : index
    %c0_135 = arith.constant 0 : index
    %c0_136 = arith.constant 0 : index
    %392 = vector.load %arg9[%c1_134, %c0_135, %c0_136] : memref<2x8x64xf32, #tpu.memory_space<vmem>>, vector<1x8x64xf32>
    %393 = vector.shape_cast %392 : vector<1x8x64xf32> to vector<8x64xf32>
    %394 = vector.shape_cast %391 : vector<8x64xf32> to vector<1x8x64xf32>
    tpu.vector_store %arg9[%c1_134, %c0_135, %c0_136], %394 {strides = array<i32>} : memref<2x8x64xf32, #tpu.memory_space<vmem>>, vector<1x8x64xf32>,
    %395 = vector.extract_strided_slice %350 {offsets = [0, 0], sizes = [16, 32], strides = [1, 1]} : vector<32x32xf32> to vector<16x32xf32>
    %396 = arith.addf %395, %226 : vector<16x32xf32>
    %cst_137 = arith.constant dense<0.000000e+00> : vector<16xf32>
    %397 = vector.multi_reduction <add>, %396, %cst_137 [1] : vector<16x32xf32> to vector<16xf32>
    %398 = vector.shape_cast %397 : vector<16xf32> to vector<16x1xf32>
    %cst_138 = arith.constant 3.200000e+01 : f32
    %399 = vector.broadcast %cst_138 : f32 to vector<16x1xf32>
    %400 = arith.divf %398, %399 : vector<16x1xf32>
    %401 = vector.broadcast %400 : vector<16x1xf32> to vector<16x32xf32>
    %402 = arith.subf %396, %401 : vector<16x32xf32>
    %403 = arith.mulf %402, %402 : vector<16x32xf32>
    %cst_139 = arith.constant dense<0.000000e+00> : vector<16xf32>
    %404 = vector.multi_reduction <add>, %403, %cst_139 [1] : vector<16x32xf32> to vector<16xf32>
    %405 = vector.shape_cast %404 : vector<16xf32> to vector<16x1xf32>
    %cst_140 = arith.constant 3.200000e+01 : f32
    %406 = vector.broadcast %cst_140 : f32 to vector<16x1xf32>
    %407 = arith.divf %405, %406 : vector<16x1xf32>
    %408 = vector.broadcast %400 : vector<16x1xf32> to vector<16x32xf32>
    %409 = arith.subf %396, %408 : vector<16x32xf32>
    %cst_141 = arith.constant 9.99999974E-6 : f32
    %410 = vector.broadcast %cst_141 : f32 to vector<16x1xf32>
    %411 = arith.addf %407, %410 : vector<16x1xf32>
    %412 = math.rsqrt %411 : vector<16x1xf32>
    %413 = vector.broadcast %412 : vector<16x1xf32> to vector<16x32xf32>
    %414 = arith.mulf %409, %413 : vector<16x32xf32>
    %415 = vector.extract_strided_slice %350 {offsets = [16, 0], sizes = [16, 32], strides = [1, 1]} : vector<32x32xf32> to vector<16x32xf32>
    %416 = arith.addf %415, %226 : vector<16x32xf32>
    %cst_142 = arith.constant dense<0.000000e+00> : vector<16xf32>
    %417 = vector.multi_reduction <add>, %416, %cst_142 [1] : vector<16x32xf32> to vector<16xf32>
    %418 = vector.shape_cast %417 : vector<16xf32> to vector<16x1xf32>
    %cst_143 = arith.constant 3.200000e+01 : f32
    %419 = vector.broadcast %cst_143 : f32 to vector<16x1xf32>
    %420 = arith.divf %418, %419 : vector<16x1xf32>
    %421 = vector.broadcast %420 : vector<16x1xf32> to vector<16x32xf32>
    %422 = arith.subf %416, %421 : vector<16x32xf32>
    %423 = arith.mulf %422, %422 : vector<16x32xf32>
    %cst_144 = arith.constant dense<0.000000e+00> : vector<16xf32>
    %424 = vector.multi_reduction <add>, %423, %cst_144 [1] : vector<16x32xf32> to vector<16xf32>
    %425 = vector.shape_cast %424 : vector<16xf32> to vector<16x1xf32>
    %cst_145 = arith.constant 3.200000e+01 : f32
    %426 = vector.broadcast %cst_145 : f32 to vector<16x1xf32>
    %427 = arith.divf %425, %426 : vector<16x1xf32>
    %428 = vector.broadcast %420 : vector<16x1xf32> to vector<16x32xf32>
    %429 = arith.subf %416, %428 : vector<16x32xf32>
    %cst_146 = arith.constant 9.99999974E-6 : f32
    %430 = vector.broadcast %cst_146 : f32 to vector<16x1xf32>
    %431 = arith.addf %427, %430 : vector<16x1xf32>
    %432 = math.rsqrt %431 : vector<16x1xf32>
    %433 = vector.broadcast %432 : vector<16x1xf32> to vector<16x32xf32>
    %434 = arith.mulf %429, %433 : vector<16x32xf32>
    %435 = tpu.concatenate %414, %434 in 1 : vector<16x32xf32>, vector<16x32xf32> -> vector<16x64xf32>
    %c1_147 = arith.constant 1 : index
    %c0_148 = arith.constant 0 : index
    %c0_149 = arith.constant 0 : index
    %436 = vector.load %arg10[%c1_147, %c0_148, %c0_149] : memref<2x16x64xf32, #tpu.memory_space<vmem>>, vector<1x16x64xf32>
    %437 = vector.shape_cast %436 : vector<1x16x64xf32> to vector<16x64xf32>
    %438 = vector.shape_cast %435 : vector<16x64xf32> to vector<1x16x64xf32>
    tpu.vector_store %arg10[%c1_147, %c0_148, %c0_149], %438 {strides = array<i32>} : memref<2x16x64xf32, #tpu.memory_space<vmem>>, vector<1x16x64xf32>,
    return
  }
  func.func @transform_0(%arg0: i32) -> (i32, i32) {
    %c0_i32 = arith.constant 0 : i32
    %c0_i32_0 = arith.constant 0 : i32
    %c0_i32_1 = arith.constant 0 : i32
    return %c0_i32, %c0_i32_0 : i32, i32
  }
  func.func @transform_1(%arg0: i32) -> (i32, i32) {
    %c0_i32 = arith.constant 0 : i32
    %c0_i32_0 = arith.constant 0 : i32
    %c0_i32_1 = arith.constant 0 : i32
    return %c0_i32, %c0_i32_0 : i32, i32
  }
  func.func @transform_2(%arg0: i32) -> (i32, i32) {
    %c0_i32 = arith.constant 0 : i32
    %c0_i32_0 = arith.constant 0 : i32
    %c0_i32_1 = arith.constant 0 : i32
    return %c0_i32, %c0_i32_0 : i32, i32
  }
  func.func @transform_3(%arg0: i32) -> (i32, i32) {
    %c0_i32 = arith.constant 0 : i32
    %c0_i32_0 = arith.constant 0 : i32
    %c0_i32_1 = arith.constant 0 : i32
    return %c0_i32, %c0_i32_0 : i32, i32
  }
  func.func @transform_4(%arg0: i32) -> (i32, i32) {
    %c0_i32 = arith.constant 0 : i32
    %c0_i32_0 = arith.constant 0 : i32
    %c0_i32_1 = arith.constant 0 : i32
    return %c0_i32, %c0_i32_0 : i32, i32
  }
  func.func @transform_5(%arg0: i32) -> (i32, i32) {
    %c0_i32 = arith.constant 0 : i32
    %c0_i32_0 = arith.constant 0 : i32
    %c0_i32_1 = arith.constant 0 : i32
    return %c0_i32, %c0_i32_0 : i32, i32
  }
  func.func @transform_6(%arg0: i32) -> (i32, i32, i32) {
    %c0_i32 = arith.constant 0 : i32
    %c0_i32_0 = arith.constant 0 : i32
    %c0_i32_1 = arith.constant 0 : i32
    %c0_i32_2 = arith.constant 0 : i32
    return %c0_i32, %c0_i32_0, %c0_i32_1 : i32, i32, i32
  }
  func.func @transform_7(%arg0: i32) -> (i32, i32, i32) {
    %c0_i32 = arith.constant 0 : i32
    %c0_i32_0 = arith.constant 0 : i32
    %c0_i32_1 = arith.constant 0 : i32
    %c0_i32_2 = arith.constant 0 : i32
    return %c0_i32, %c0_i32_0, %c0_i32_1 : i32, i32, i32
  }
  func.func @transform_8(%arg0: i32) -> (i32, i32, i32) {
    %c0_i32 = arith.constant 0 : i32
    %c0_i32_0 = arith.constant 0 : i32
    %c0_i32_1 = arith.constant 0 : i32
    %c0_i32_2 = arith.constant 0 : i32
    return %c0_i32, %c0_i32_0, %c0_i32_1 : i32, i32, i32
  }
  func.func @transform_9(%arg0: i32) -> (i32, i32, i32) {
    %c0_i32 = arith.constant 0 : i32
    %c0_i32_0 = arith.constant 0 : i32
    %c0_i32_1 = arith.constant 0 : i32
    %c0_i32_2 = arith.constant 0 : i32
    return %c0_i32, %c0_i32_0, %c0_i32_1 : i32, i32, i32
  }
}

</mosaic_0001>

<llo_original>
// kernel: co_attention_layer_counter.1
$region0: #{co_attention_layer_counter.1}
  #allocation0 [shape = 'u32[]', space=smem, size = 0x4, offset = 0x4, fixed_abs, tag = 'smem constant byte address 0x4 - core index']
  #allocation1 [shape = 'u32[144,128]{1,0:T(1,128)}', space=vmem, size = 0x12000, scoped, tag = 'internal scratch']
  %s0 = inlined_call_operand.hbm [shape: f32[16,32], index: 0, kind: input, shape index: {}]
  %s1 = inlined_call_operand.vmem [shape: f32[32,32], index: 1, kind: input, shape index: {}]
  %s2 = inlined_call_operand.vmem [shape: f32[32,32], index: 2, kind: input, shape index: {}]
  %s3 = inlined_call_operand.hbm [shape: f32[32,32], index: 3, kind: input, shape index: {}]
  %s4 = inlined_call_operand.hbm [shape: f32[32,32], index: 4, kind: input, shape index: {}]
  %s5 = inlined_call_operand.hbm [shape: f32[32,32], index: 5, kind: input, shape index: {}]
  %s6 = inlined_call_operand.hbm [shape: f32[2,8,16], index: 6, kind: input, shape index: {}]
  %s7 = inlined_call_operand.vmem [shape: f32[2,16,8], index: 7, kind: input, shape index: {}]
  %s8 = inlined_call_operand.vmem [shape: f32[2,8,64], index: 8, kind: output, shape index: {0}]
  %s9 = inlined_call_operand.vmem [shape: f32[2,16,64], index: 9, kind: output, shape index: {1}]
  %10 = xla_tuple %s8, %s9
  %s11 = sld [smem:[#allocation0]]
  $region70: #{co_attention_layer_counter.1} parent=0
    _
  %s13 = ssub.s32 1, %s11
  %s14 = scalar_select 0, %s13, %s11
  $region1: #{co_attention_layer_counter.1} parent=0
    #allocation2 [shape = 'u8[8192]{0}', space=vmem, size = 0x2000, scoped, tag = 'input window, operand 0, single buffered']
    #allocation3 [shape = 's32[1]{0}', space=sflag, size = 0x4, scoped, tag = 'scoped memory for co_attention_layer_counter.1']
    #allocation4 [shape = 'u8[16384]{0}', space=vmem, size = 0x4000, scoped, tag = 'input window, operand 3, single buffered']
    #allocation5 [shape = 's32[1]{0}', space=sflag, size = 0x4, scoped, tag = 'scoped memory for co_attention_layer_counter.1']
    #allocation6 [shape = 'u8[16384]{0}', space=vmem, size = 0x4000, scoped, tag = 'input window, operand 4, single buffered']
    #allocation7 [shape = 'u8[16384]{0}', space=vmem, size = 0x4000, scoped, tag = 'input window, operand 5, single buffered']
    #allocation8 [shape = 's32[1]{0}', space=sflag, size = 0x4, scoped, tag = 'scoped memory for co_attention_layer_counter.1']
    #allocation9 [shape = 'u8[8192]{0}', space=vmem, size = 0x2000, scoped, tag = 'input window, operand 6, single buffered']
    %15 = vsyncpa [#allocation3], 0
    %16 = vsyncpa [#allocation5], 0
    %17 = vsyncpa [#allocation8], 0
    // Predicated region
    $region2: #{co_attention_layer_counter.1} parent=1 // pred_check
      _
    $region3: #{co_attention_layer_counter.1} parent=1 // pred_check_branch
      %19 = sbr.rel (0) target = $region5
    $region4: #{co_attention_layer_counter.1} parent=1 // pred_region
      %s21 = ssub.s32 256, 256
      %22 = vsyncadd [#allocation3], %s21
      %s23 = sshll.u32 [#allocation2], 4
      %s24 = int_to_ptr.vmem [resolvable:$true] %s23
      %29 = dma.hbm_to_vmem [thread:$0]  %s0, 256, %s24, [#allocation3], 128, 128, 8
    $region5: #{co_attention_layer_counter.1} parent=1 // pred_fallthru
      _
    // Predicated region
    $region6: #{co_attention_layer_counter.1} parent=1 // pred_check
      _
    $region7: #{co_attention_layer_counter.1} parent=1 // pred_check_branch
      %31 = sbr.rel (0) target = $region9
    $region8: #{co_attention_layer_counter.1} parent=1 // pred_region
      _
    $region9: #{co_attention_layer_counter.1} parent=1 // pred_fallthru
      _
    // Predicated region
    $region10: #{co_attention_layer_counter.1} parent=1 // pred_check
      _
    $region11: #{co_attention_layer_counter.1} parent=1 // pred_check_branch
      %33 = sbr.rel (0) target = $region13
    $region12: #{co_attention_layer_counter.1} parent=1 // pred_region
      _
    $region13: #{co_attention_layer_counter.1} parent=1 // pred_fallthru
      _
    // Predicated region
    $region14: #{co_attention_layer_counter.1} parent=1 // pred_check
      _
    $region15: #{co_attention_layer_counter.1} parent=1 // pred_check_branch
      %35 = sbr.rel (0) target = $region17
    $region16: #{co_attention_layer_counter.1} parent=1 // pred_region
      %s37 = ssub.s32 512, 512
      %38 = vsyncadd [#allocation5], %s37
      %s39 = sshll.u32 [#allocation4], 4
      %s40 = int_to_ptr.vmem [resolvable:$true] %s39
      %45 = dma.hbm_to_vmem [thread:$0]  %s3, 512, %s40, [#allocation5], 128, 128, 8
    $region17: #{co_attention_layer_counter.1} parent=1 // pred_fallthru
      _
    // Predicated region
    $region18: #{co_attention_layer_counter.1} parent=1 // pred_check
      _
    $region19: #{co_attention_layer_counter.1} parent=1 // pred_check_branch
      %47 = sbr.rel (0) target = $region21
    $region20: #{co_attention_layer_counter.1} parent=1 // pred_region
      %s49 = ssub.s32 512, 512
      %50 = vsyncadd [#allocation5], %s49
      %s51 = sshll.u32 [#allocation6], 4
      %s52 = int_to_ptr.vmem [resolvable:$true] %s51
      %57 = dma.hbm_to_vmem [thread:$0]  %s4, 512, %s52, [#allocation5], 128, 128, 8
    $region21: #{co_attention_layer_counter.1} parent=1 // pred_fallthru
      _
    // Predicated region
    $region22: #{co_attention_layer_counter.1} parent=1 // pred_check
      _
    $region23: #{co_attention_layer_counter.1} parent=1 // pred_check_branch
      %59 = sbr.rel (0) target = $region25
    $region24: #{co_attention_layer_counter.1} parent=1 // pred_region
      %s61 = ssub.s32 512, 512
      %62 = vsyncadd [#allocation8], %s61
      %s63 = sshll.u32 [#allocation7], 4
      %s64 = int_to_ptr.vmem [resolvable:$true] %s63
      %69 = dma.hbm_to_vmem [thread:$0]  %s5, 512, %s64, [#allocation8], 128, 128, 8
    $region25: #{co_attention_layer_counter.1} parent=1 // pred_fallthru
      _
    // Predicated region
    $region26: #{co_attention_layer_counter.1} parent=1 // pred_check
      _
    $region27: #{co_attention_layer_counter.1} parent=1 // pred_check_branch
      %71 = sbr.rel (0) target = $region29
    $region28: #{co_attention_layer_counter.1} parent=1 // pred_region
      %s73 = ssub.s32 256, 256
      %74 = vsyncadd [#allocation8], %s73
      %s75 = sshll.u32 [#allocation9], 4
      %s76 = int_to_ptr.vmem [resolvable:$true] %s75
      %81 = dma.hbm_to_vmem [thread:$0]  %s6, 256, %s76, [#allocation8], 128, 128, 8
    $region29: #{co_attention_layer_counter.1} parent=1 // pred_fallthru
      _
    // Predicated region
    $region30: #{co_attention_layer_counter.1} parent=1 // pred_check
      _
    $region31: #{co_attention_layer_counter.1} parent=1 // pred_check_branch
      %83 = sbr.rel (0) target = $region33
    $region32: #{co_attention_layer_counter.1} parent=1 // pred_region
      _
    $region33: #{co_attention_layer_counter.1} parent=1 // pred_fallthru
      _
    // Predicated region
    $region34: #{co_attention_layer_counter.1} parent=1 // pred_check
      _
    $region35: #{co_attention_layer_counter.1} parent=1 // pred_check_branch
      %85 = sbr.rel (0) target = $region37
    $region36: #{co_attention_layer_counter.1} parent=1 // pred_region
      %86 = dma.done [#allocation3], 256
    $region37: #{co_attention_layer_counter.1} parent=1 // pred_fallthru
      _
    // Predicated region
    $region38: #{co_attention_layer_counter.1} parent=1 // pred_check
      _
    $region39: #{co_attention_layer_counter.1} parent=1 // pred_check_branch
      %88 = sbr.rel (0) target = $region41
    $region40: #{co_attention_layer_counter.1} parent=1 // pred_region
      %89 = dma.done [#allocation5], 512
    $region41: #{co_attention_layer_counter.1} parent=1 // pred_fallthru
      _
    // Predicated region
    $region42: #{co_attention_layer_counter.1} parent=1 // pred_check
      _
    $region43: #{co_attention_layer_counter.1} parent=1 // pred_check_branch
      %91 = sbr.rel (0) target = $region45
    $region44: #{co_attention_layer_counter.1} parent=1 // pred_region
      %92 = dma.done [#allocation5], 512
    $region45: #{co_attention_layer_counter.1} parent=1 // pred_fallthru
      _
    // Predicated region
    $region46: #{co_attention_layer_counter.1} parent=1 // pred_check
      _
    $region47: #{co_attention_layer_counter.1} parent=1 // pred_check_branch
      %94 = sbr.rel (0) target = $region49
    $region48: #{co_attention_layer_counter.1} parent=1 // pred_region
      %95 = dma.done [#allocation8], 512
    $region49: #{co_attention_layer_counter.1} parent=1 // pred_fallthru
      _
    // Predicated region
    $region50: #{co_attention_layer_counter.1} parent=1 // pred_check
      _
    $region51: #{co_attention_layer_counter.1} parent=1 // pred_check_branch
      %97 = sbr.rel (0) target = $region53
    $region52: #{co_attention_layer_counter.1} parent=1 // pred_region
      %98 = dma.done [#allocation8], 256
    $region53: #{co_attention_layer_counter.1} parent=1 // pred_fallthru
      _
    %v99 = vld [vmem:[#allocation2] sm:$0xff]
    %v100 = vld [vmem:[#allocation2 + $0x8] sm:$0xff]
    %v101 = vld [vmem:[%s1] sm:$0xff]
    %v102 = vld [vmem:[%s1 + $0x8] sm:$0xff]
    %v103 = vld [vmem:[%s1 + $0x10] sm:$0xff]
    %v104 = vld [vmem:[%s1 + $0x18] sm:$0xff]
    %v105 = vld [vmem:[%s2] sm:$0xff]
    %v106 = vld [vmem:[%s2 + $0x8] sm:$0xff]
    %v107 = vld [vmem:[%s2 + $0x10] sm:$0xff]
    %v108 = vld [vmem:[%s2 + $0x18] sm:$0xff]
    %vm109 = vcmask 261120
    %v111 = vsel %vm109, %v99, 0
    %v114 = vsel %vm109, %v100, 0
    %116 = vmatprep.subr.mxu0 0.0
    %117 = vmatpush1.msra.mxu0 %v105
    %118 = vmatprep.subr.mxu0 0.0
    %119 = vmatpush1.msra.mxu0 %v106
    %120 = vmatprep.subr.mxu0 0.0
    %121 = vmatpush1.msra.mxu0 %v107
    %122 = vmatprep.subr.mxu0 0.0
    %123 = vmatpush1.msra.mxu0 %v108
    %124 = vmatprep.subr.mxu0 0.0
    %125 = vmatpush1.msra.mxu0 0.0
    %126 = vmatprep.subr.mxu0 0.0
    %127 = vmatpush1.msra.mxu0 0.0
    %128 = vmatprep.subr.mxu0 0.0
    %129 = vmatpush1.msra.mxu0 0.0
    %130 = vmatprep.subr.mxu0 0.0
    %131 = vmatpush1.msra.mxu0 0.0
    %132 = vmatprep.subr.mxu0 0.0
    %133 = vmatpush1.msra.mxu0 0.0
    %134 = vmatprep.subr.mxu0 0.0
    %135 = vmatpush1.msra.mxu0 0.0
    %136 = vmatprep.subr.mxu0 0.0
    %137 = vmatpush1.msra.mxu0 0.0
    %138 = vmatprep.subr.mxu0 0.0
    %139 = vmatpush1.msra.mxu0 0.0
    %140 = vmatprep.subr.mxu0 0.0
    %141 = vmatpush1.msra.mxu0 0.0
    %142 = vmatprep.subr.mxu0 0.0
    %143 = vmatpush1.msra.mxu0 0.0
    %144 = vmatprep.subr.mxu0 0.0
    %145 = vmatpush1.msra.mxu0 0.0
    %146 = vmatprep.subr.mxu0 0.0
    %147 = vmatpush1.msra.mxu0 0.0
    %148 = vmatprep.subr.mxu0 0.0
    %149 = vmatpush1.msra.mxu0 0.0
    %150 = vmatprep.subr.mxu0 0.0
    %151 = vmatpush1.msra.mxu0 0.0
    %152 = vmatprep.subr.mxu0 0.0
    %153 = vmatpush1.msra.mxu0 0.0
    %154 = vmatprep.subr.mxu0 0.0
    %155 = vmatpush1.msra.mxu0 0.0
    %156 = vmatprep.subr.mxu0 0.0
    %157 = vmatpush1.msra.mxu0 0.0
    %158 = vmatprep.subr.mxu0 0.0
    %159 = vmatpush1.msra.mxu0 0.0
    %160 = vmatprep.subr.mxu0 0.0
    %161 = vmatpush1.msra.mxu0 0.0
    %162 = vmatprep.subr.mxu0 0.0
    %163 = vmatpush1.msra.mxu0 0.0
    %164 = vmatprep.subr.mxu0 0.0
    %165 = vmatpush1.msra.mxu0 0.0
    %166 = vmatprep.subr.mxu0 0.0
    %167 = vmatpush1.msra.mxu0 0.0
    %168 = vmatprep.subr.mxu0 0.0
    %169 = vmatpush1.msra.mxu0 0.0
    %170 = vmatprep.subr.mxu0 0.0
    %171 = vmatpush1.msra.mxu0 0.0
    %172 = vmatprep.subr.mxu0 0.0
    %173 = vmatpush1.msra.mxu0 0.0
    %174 = vmatprep.subr.mxu0 0.0
    %175 = vmatpush1.msra.mxu0 0.0
    %176 = vmatprep.subr.mxu0 0.0
    %177 = vmatpush1.msra.mxu0 0.0
    %178 = vmatprep.subr.mxu0 0.0
    %179 = vmatpush1.msra.mxu0 0.0
    %180 = vmatprep.mubr.f32.mxu0 0.0
    %181 = vmatmul.mubr.f32.gmra.mrb[0].mxu0 %v111
    %v182 = vpop.f32.mrb[0].mxu0
    %v183 = vadd.f32 0.0, %v182
    %v184 = vpop.f32.mrb[0].mxu0
    %185 = vmatprep.mubr.f32.mxu0 0.0
    %186 = vmatmul.mubr.f32.gmra.mrb[0].mxu0 %v114
    %v187 = vpop.f32.mrb[0].mxu0
    %v188 = vadd.f32 0.0, %v187
    %v189 = vpop.f32.mrb[0].mxu0
    %190 = vdwg.mxu0
    %v191 = vld [vmem:[#allocation4] sm:$0xff]
    %v192 = vld [vmem:[#allocation4 + $0x8] sm:$0xff]
    %v193 = vld [vmem:[#allocation4 + $0x10] sm:$0xff]
    %v194 = vld [vmem:[#allocation4 + $0x18] sm:$0xff]
    %v196 = vsel %vm109, %v101, 0
    %v199 = vsel %vm109, %v102, 0
    %v202 = vsel %vm109, %v103, 0
    %v205 = vsel %vm109, %v104, 0
    %207 = vmatprep.subr.mxu0 0.0
    %208 = vmatpush1.msra.mxu0 %v191
    %209 = vmatprep.subr.mxu0 0.0
    %210 = vmatpush1.msra.mxu0 %v192
    %211 = vmatprep.subr.mxu0 0.0
    %212 = vmatpush1.msra.mxu0 %v193
    %213 = vmatprep.subr.mxu0 0.0
    %214 = vmatpush1.msra.mxu0 %v194
    %215 = vmatprep.subr.mxu0 0.0
    %216 = vmatpush1.msra.mxu0 0.0
    %217 = vmatprep.subr.mxu0 0.0
    %218 = vmatpush1.msra.mxu0 0.0
    %219 = vmatprep.subr.mxu0 0.0
    %220 = vmatpush1.msra.mxu0 0.0
    %221 = vmatprep.subr.mxu0 0.0
    %222 = vmatpush1.msra.mxu0 0.0
    %223 = vmatprep.subr.mxu0 0.0
    %224 = vmatpush1.msra.mxu0 0.0
    %225 = vmatprep.subr.mxu0 0.0
    %226 = vmatpush1.msra.mxu0 0.0
    %227 = vmatprep.subr.mxu0 0.0
    %228 = vmatpush1.msra.mxu0 0.0
    %229 = vmatprep.subr.mxu0 0.0
    %230 = vmatpush1.msra.mxu0 0.0
    %231 = vmatprep.subr.mxu0 0.0
    %232 = vmatpush1.msra.mxu0 0.0
    %233 = vmatprep.subr.mxu0 0.0
    %234 = vmatpush1.msra.mxu0 0.0
    %235 = vmatprep.subr.mxu0 0.0
    %236 = vmatpush1.msra.mxu0 0.0
    %237 = vmatprep.subr.mxu0 0.0
    %238 = vmatpush1.msra.mxu0 0.0
    %239 = vmatprep.subr.mxu0 0.0
    %240 = vmatpush1.msra.mxu0 0.0
    %241 = vmatprep.subr.mxu0 0.0
    %242 = vmatpush1.msra.mxu0 0.0
    %243 = vmatprep.subr.mxu0 0.0
    %244 = vmatpush1.msra.mxu0 0.0
    %245 = vmatprep.subr.mxu0 0.0
    %246 = vmatpush1.msra.mxu0 0.0
    %247 = vmatprep.subr.mxu0 0.0
    %248 = vmatpush1.msra.mxu0 0.0
    %249 = vmatprep.subr.mxu0 0.0
    %250 = vmatpush1.msra.mxu0 0.0
    %251 = vmatprep.subr.mxu0 0.0
    %252 = vmatpush1.msra.mxu0 0.0
    %253 = vmatprep.subr.mxu0 0.0
    %254 = vmatpush1.msra.mxu0 0.0
    %255 = vmatprep.subr.mxu0 0.0
    %256 = vmatpush1.msra.mxu0 0.0
    %257 = vmatprep.subr.mxu0 0.0
    %258 = vmatpush1.msra.mxu0 0.0
    %259 = vmatprep.subr.mxu0 0.0
    %260 = vmatpush1.msra.mxu0 0.0
    %261 = vmatprep.subr.mxu0 0.0
    %262 = vmatpush1.msra.mxu0 0.0
    %263 = vmatprep.subr.mxu0 0.0
    %264 = vmatpush1.msra.mxu0 0.0
    %265 = vmatprep.subr.mxu0 0.0
    %266 = vmatpush1.msra.mxu0 0.0
    %267 = vmatprep.subr.mxu0 0.0
    %268 = vmatpush1.msra.mxu0 0.0
    %269 = vmatprep.subr.mxu0 0.0
    %270 = vmatpush1.msra.mxu0 0.0
    %271 = vmatprep.mubr.f32.mxu0 0.0
    %272 = vmatmul.mubr.f32.gmra.mrb[0].mxu0 %v196
    %v273 = vpop.f32.mrb[0].mxu0
    %v274 = vadd.f32 0.0, %v273
    %v275 = vpop.f32.mrb[0].mxu0
    %276 = vmatprep.mubr.f32.mxu0 0.0
    %277 = vmatmul.mubr.f32.gmra.mrb[0].mxu0 %v199
    %v278 = vpop.f32.mrb[0].mxu0
    %v279 = vadd.f32 0.0, %v278
    %v280 = vpop.f32.mrb[0].mxu0
    %281 = vmatprep.mubr.f32.mxu0 0.0
    %282 = vmatmul.mubr.f32.gmra.mrb[0].mxu0 %v202
    %v283 = vpop.f32.mrb[0].mxu0
    %v284 = vadd.f32 0.0, %v283
    %v285 = vpop.f32.mrb[0].mxu0
    %286 = vmatprep.mubr.f32.mxu0 0.0
    %287 = vmatmul.mubr.f32.gmra.mrb[0].mxu0 %v205
    %v288 = vpop.f32.mrb[0].mxu0
    %v289 = vadd.f32 0.0, %v288
    %v290 = vpop.f32.mrb[0].mxu0
    %291 = vdwg.mxu0
    %v292 = vld [vmem:[#allocation6] sm:$0xff]
    %v293 = vld [vmem:[#allocation6 + $0x8] sm:$0xff]
    %v294 = vld [vmem:[#allocation6 + $0x10] sm:$0xff]
    %v295 = vld [vmem:[#allocation6 + $0x18] sm:$0xff]
    %296 = vmatprep.subr.mxu0 0.0
    %297 = vmatpush1.msra.mxu0 %v292
    %298 = vmatprep.subr.mxu0 0.0
    %299 = vmatpush1.msra.mxu0 %v293
    %300 = vmatprep.subr.mxu0 0.0
    %301 = vmatpush1.msra.mxu0 %v294
    %302 = vmatprep.subr.mxu0 0.0
    %303 = vmatpush1.msra.mxu0 %v295
    %304 = vmatprep.subr.mxu0 0.0
    %305 = vmatpush1.msra.mxu0 0.0
    %306 = vmatprep.subr.mxu0 0.0
    %307 = vmatpush1.msra.mxu0 0.0
    %308 = vmatprep.subr.mxu0 0.0
    %309 = vmatpush1.msra.mxu0 0.0
    %310 = vmatprep.subr.mxu0 0.0
    %311 = vmatpush1.msra.mxu0 0.0
    %312 = vmatprep.subr.mxu0 0.0
    %313 = vmatpush1.msra.mxu0 0.0
    %314 = vmatprep.subr.mxu0 0.0
    %315 = vmatpush1.msra.mxu0 0.0
    %316 = vmatprep.subr.mxu0 0.0
    %317 = vmatpush1.msra.mxu0 0.0
    %318 = vmatprep.subr.mxu0 0.0
    %319 = vmatpush1.msra.mxu0 0.0
    %320 = vmatprep.subr.mxu0 0.0
    %321 = vmatpush1.msra.mxu0 0.0
    %322 = vmatprep.subr.mxu0 0.0
    %323 = vmatpush1.msra.mxu0 0.0
    %324 = vmatprep.subr.mxu0 0.0
    %325 = vmatpush1.msra.mxu0 0.0
    %326 = vmatprep.subr.mxu0 0.0
    %327 = vmatpush1.msra.mxu0 0.0
    %328 = vmatprep.subr.mxu0 0.0
    %329 = vmatpush1.msra.mxu0 0.0
    %330 = vmatprep.subr.mxu0 0.0
    %331 = vmatpush1.msra.mxu0 0.0
    %332 = vmatprep.subr.mxu0 0.0
    %333 = vmatpush1.msra.mxu0 0.0
    %334 = vmatprep.subr.mxu0 0.0
    %335 = vmatpush1.msra.mxu0 0.0
    %336 = vmatprep.subr.mxu0 0.0
    %337 = vmatpush1.msra.mxu0 0.0
    %338 = vmatprep.subr.mxu0 0.0
    %339 = vmatpush1.msra.mxu0 0.0
    %340 = vmatprep.subr.mxu0 0.0
    %341 = vmatpush1.msra.mxu0 0.0
    %342 = vmatprep.subr.mxu0 0.0
    %343 = vmatpush1.msra.mxu0 0.0
    %344 = vmatprep.subr.mxu0 0.0
    %345 = vmatpush1.msra.mxu0 0.0
    %346 = vmatprep.subr.mxu0 0.0
    %347 = vmatpush1.msra.mxu0 0.0
    %348 = vmatprep.subr.mxu0 0.0
    %349 = vmatpush1.msra.mxu0 0.0
    %350 = vmatprep.subr.mxu0 0.0
    %351 = vmatpush1.msra.mxu0 0.0
    %352 = vmatprep.subr.mxu0 0.0
    %353 = vmatpush1.msra.mxu0 0.0
    %354 = vmatprep.subr.mxu0 0.0
    %355 = vmatpush1.msra.mxu0 0.0
    %356 = vmatprep.subr.mxu0 0.0
    %357 = vmatpush1.msra.mxu0 0.0
    %358 = vmatprep.subr.mxu0 0.0
    %359 = vmatpush1.msra.mxu0 0.0
    %360 = vmatprep.mubr.f32.mxu0 0.0
    %361 = vmatmul.mubr.f32.gmra.mrb[0].mxu0 %v111
    %v362 = vpop.f32.mrb[0].mxu0
    %v363 = vadd.f32 0.0, %v362
    %v364 = vpop.f32.mrb[0].mxu0
    %365 = vmatprep.mubr.f32.mxu0 0.0
    %366 = vmatmul.mubr.f32.gmra.mrb[0].mxu0 %v114
    %v367 = vpop.f32.mrb[0].mxu0
    %v368 = vadd.f32 0.0, %v367
    %v369 = vpop.f32.mrb[0].mxu0
    %370 = vdwg.mxu0
    %v371 = vld [vmem:[#allocation7] sm:$0xff]
    %v372 = vld [vmem:[#allocation7 + $0x8] sm:$0xff]
    %v373 = vld [vmem:[#allocation7 + $0x10] sm:$0xff]
    %v374 = vld [vmem:[#allocation7 + $0x18] sm:$0xff]
    %375 = vmatprep.subr.mxu0 0.0
    %376 = vmatpush1.msra.mxu0 %v371
    %377 = vmatprep.subr.mxu0 0.0
    %378 = vmatpush1.msra.mxu0 %v372
    %379 = vmatprep.subr.mxu0 0.0
    %380 = vmatpush1.msra.mxu0 %v373
    %381 = vmatprep.subr.mxu0 0.0
    %382 = vmatpush1.msra.mxu0 %v374
    %383 = vmatprep.subr.mxu0 0.0
    %384 = vmatpush1.msra.mxu0 0.0
    %385 = vmatprep.subr.mxu0 0.0
    %386 = vmatpush1.msra.mxu0 0.0
    %387 = vmatprep.subr.mxu0 0.0
    %388 = vmatpush1.msra.mxu0 0.0
    %389 = vmatprep.subr.mxu0 0.0
    %390 = vmatpush1.msra.mxu0 0.0
    %391 = vmatprep.subr.mxu0 0.0
    %392 = vmatpush1.msra.mxu0 0.0
    %393 = vmatprep.subr.mxu0 0.0
    %394 = vmatpush1.msra.mxu0 0.0
    %395 = vmatprep.subr.mxu0 0.0
    %396 = vmatpush1.msra.mxu0 0.0
    %397 = vmatprep.subr.mxu0 0.0
    %398 = vmatpush1.msra.mxu0 0.0
    %399 = vmatprep.subr.mxu0 0.0
    %400 = vmatpush1.msra.mxu0 0.0
    %401 = vmatprep.subr.mxu0 0.0
    %402 = vmatpush1.msra.mxu0 0.0
    %403 = vmatprep.subr.mxu0 0.0
    %404 = vmatpush1.msra.mxu0 0.0
    %405 = vmatprep.subr.mxu0 0.0
    %406 = vmatpush1.msra.mxu0 0.0
    %407 = vmatprep.subr.mxu0 0.0
    %408 = vmatpush1.msra.mxu0 0.0
    %409 = vmatprep.subr.mxu0 0.0
    %410 = vmatpush1.msra.mxu0 0.0
    %411 = vmatprep.subr.mxu0 0.0
    %412 = vmatpush1.msra.mxu0 0.0
    %413 = vmatprep.subr.mxu0 0.0
    %414 = vmatpush1.msra.mxu0 0.0
    %415 = vmatprep.subr.mxu0 0.0
    %416 = vmatpush1.msra.mxu0 0.0
    %417 = vmatprep.subr.mxu0 0.0
    %418 = vmatpush1.msra.mxu0 0.0
    %419 = vmatprep.subr.mxu0 0.0
    %420 = vmatpush1.msra.mxu0 0.0
    %421 = vmatprep.subr.mxu0 0.0
    %422 = vmatpush1.msra.mxu0 0.0
    %423 = vmatprep.subr.mxu0 0.0
    %424 = vmatpush1.msra.mxu0 0.0
    %425 = vmatprep.subr.mxu0 0.0
    %426 = vmatpush1.msra.mxu0 0.0
    %427 = vmatprep.subr.mxu0 0.0
    %428 = vmatpush1.msra.mxu0 0.0
    %429 = vmatprep.subr.mxu0 0.0
    %430 = vmatpush1.msra.mxu0 0.0
    %431 = vmatprep.subr.mxu0 0.0
    %432 = vmatpush1.msra.mxu0 0.0
    %433 = vmatprep.subr.mxu0 0.0
    %434 = vmatpush1.msra.mxu0 0.0
    %435 = vmatprep.subr.mxu0 0.0
    %436 = vmatpush1.msra.mxu0 0.0
    %437 = vmatprep.subr.mxu0 0.0
    %438 = vmatpush1.msra.mxu0 0.0
    %439 = vmatprep.mubr.f32.mxu0 0.0
    %440 = vmatmul.mubr.f32.gmra.mrb[0].mxu0 %v196
    %v441 = vpop.f32.mrb[0].mxu0
    %v442 = vadd.f32 0.0, %v441
    %v443 = vpop.f32.mrb[0].mxu0
    %444 = vmatprep.mubr.f32.mxu0 0.0
    %445 = vmatmul.mubr.f32.gmra.mrb[0].mxu0 %v199
    %v446 = vpop.f32.mrb[0].mxu0
    %v447 = vadd.f32 0.0, %v446
    %v448 = vpop.f32.mrb[0].mxu0
    %449 = vmatprep.mubr.f32.mxu0 0.0
    %450 = vmatmul.mubr.f32.gmra.mrb[0].mxu0 %v202
    %v451 = vpop.f32.mrb[0].mxu0
    %v452 = vadd.f32 0.0, %v451
    %v453 = vpop.f32.mrb[0].mxu0
    %454 = vmatprep.mubr.f32.mxu0 0.0
    %455 = vmatmul.mubr.f32.gmra.mrb[0].mxu0 %v205
    %v456 = vpop.f32.mrb[0].mxu0
    %v457 = vadd.f32 0.0, %v456
    %v458 = vpop.f32.mrb[0].mxu0
    %459 = vdwg.mxu0
    %v460 = vsel %vm109, %v99, 0.0
    %461 = vadd.xlane.f32.xlu0 %v460
    %v462 = vpop.xlane.xlu0 %461
    %vm463 = vcmp.eq.f32.partialorder %v462, 0.0
    %v464 = vsel %vm109, %v101, 0.0
    %465 = vadd.xlane.f32.xlu0 %v464
    %v466 = vpop.xlane.xlu0 %465
    %v467 = vsel %vm109, %v102, 0.0
    %468 = vadd.xlane.f32.xlu0 %v467
    %v469 = vpop.xlane.xlu0 %468
    %vm470 = vcmp.eq.f32.partialorder %v466, 0.0
    %vm471 = vcmp.eq.f32.partialorder %v469, 0.0
    %v473 = vsel %vm109, 1.0, 0
    %475 = vmatprep.subr.mxu0 0.0
    %476 = vmatpush1.xpose.msra.mxu0 %v196
    %477 = vmatprep.subr.mxu0 0.0
    %478 = vmatpush1.xpose.msra.mxu0 %v199
    %479 = vmatprep.subr.mxu0 0.0
    %480 = vmatpush1.xpose.msra.mxu0 0.0
    %481 = vmatprep.subr.mxu0 0.0
    %482 = vmatpush1.xpose.msra.mxu0 0.0
    %483 = vmatprep.subr.mxu0 0.0
    %484 = vmatpush1.xpose.msra.mxu0 0.0
    %485 = vmatprep.subr.mxu0 0.0
    %486 = vmatpush1.xpose.msra.mxu0 0.0
    %487 = vmatprep.subr.mxu0 0.0
    %488 = vmatpush1.xpose.msra.mxu0 0.0
    %489 = vmatprep.subr.mxu0 0.0
    %490 = vmatpush1.xpose.msra.mxu0 0.0
    %491 = vmatprep.subr.mxu0 0.0
    %492 = vmatpush1.xpose.msra.mxu0 0.0
    %493 = vmatprep.subr.mxu0 0.0
    %494 = vmatpush1.xpose.msra.mxu0 0.0
    %495 = vmatprep.subr.mxu0 0.0
    %496 = vmatpush1.xpose.msra.mxu0 0.0
    %497 = vmatprep.subr.mxu0 0.0
    %498 = vmatpush1.xpose.msra.mxu0 0.0
    %499 = vmatprep.subr.mxu0 0.0
    %500 = vmatpush1.xpose.msra.mxu0 0.0
    %501 = vmatprep.subr.mxu0 0.0
    %502 = vmatpush1.xpose.msra.mxu0 0.0
    %503 = vmatprep.subr.mxu0 0.0
    %504 = vmatpush1.xpose.msra.mxu0 0.0
    %505 = vmatprep.subr.mxu0 0.0
    %506 = vmatpush1.xpose.msra.mxu0 0.0
    %507 = vmatprep.subr.mxu0 0.0
    %508 = vmatpush1.xpose.msra.mxu0 0.0
    %509 = vmatprep.subr.mxu0 0.0
    %510 = vmatpush1.xpose.msra.mxu0 0.0
    %511 = vmatprep.subr.mxu0 0.0
    %512 = vmatpush1.xpose.msra.mxu0 0.0
    %513 = vmatprep.subr.mxu0 0.0
    %514 = vmatpush1.xpose.msra.mxu0 0.0
    %515 = vmatprep.subr.mxu0 0.0
    %516 = vmatpush1.xpose.msra.mxu0 0.0
    %517 = vmatprep.subr.mxu0 0.0
    %518 = vmatpush1.xpose.msra.mxu0 0.0
    %519 = vmatprep.subr.mxu0 0.0
    %520 = vmatpush1.xpose.msra.mxu0 0.0
    %521 = vmatprep.subr.mxu0 0.0
    %522 = vmatpush1.xpose.msra.mxu0 0.0
    %523 = vmatprep.subr.mxu0 0.0
    %524 = vmatpush1.xpose.msra.mxu0 0.0
    %525 = vmatprep.subr.mxu0 0.0
    %526 = vmatpush1.xpose.msra.mxu0 0.0
    %527 = vmatprep.subr.mxu0 0.0
    %528 = vmatpush1.xpose.msra.mxu0 0.0
    %529 = vmatprep.subr.mxu0 0.0
    %530 = vmatpush1.xpose.msra.mxu0 0.0
    %531 = vmatprep.subr.mxu0 0.0
    %532 = vmatpush1.xpose.msra.mxu0 0.0
    %533 = vmatprep.subr.mxu0 0.0
    %534 = vmatpush1.xpose.msra.mxu0 0.0
    %535 = vmatprep.subr.mxu0 0.0
    %536 = vmatpush1.xpose.msra.mxu0 0.0
    %537 = vmatprep.subr.mxu0 0.0
    %538 = vmatpush1.xpose.msra.mxu0 0.0
    %539 = vmatprep.mubr.f32.mxu0 0.0
    %540 = vmatmul.mubr.f32.gmra.mrb[0].mxu0 %v473
    %v541 = vpop.f32.mrb[0].mxu0
    %v542 = vadd.f32 0.0, %v541
    %v543 = vpop.f32.mrb[0].mxu0
    %544 = vdwg.mxu0
    %vm545 = vcmp.eq.f32.partialorder %v542, 0.0
    %546 = vmatprep.subr.mxu0 0.0
    %547 = vmatpush1.xpose.msra.mxu0 %v111
    %548 = vmatprep.subr.mxu0 0.0
    %549 = vmatpush1.xpose.msra.mxu0 0.0
    %550 = vmatprep.subr.mxu0 0.0
    %551 = vmatpush1.xpose.msra.mxu0 0.0
    %552 = vmatprep.subr.mxu0 0.0
    %553 = vmatpush1.xpose.msra.mxu0 0.0
    %554 = vmatprep.subr.mxu0 0.0
    %555 = vmatpush1.xpose.msra.mxu0 0.0
    %556 = vmatprep.subr.mxu0 0.0
    %557 = vmatpush1.xpose.msra.mxu0 0.0
    %558 = vmatprep.subr.mxu0 0.0
    %559 = vmatpush1.xpose.msra.mxu0 0.0
    %560 = vmatprep.subr.mxu0 0.0
    %561 = vmatpush1.xpose.msra.mxu0 0.0
    %562 = vmatprep.subr.mxu0 0.0
    %563 = vmatpush1.xpose.msra.mxu0 0.0
    %564 = vmatprep.subr.mxu0 0.0
    %565 = vmatpush1.xpose.msra.mxu0 0.0
    %566 = vmatprep.subr.mxu0 0.0
    %567 = vmatpush1.xpose.msra.mxu0 0.0
    %568 = vmatprep.subr.mxu0 0.0
    %569 = vmatpush1.xpose.msra.mxu0 0.0
    %570 = vmatprep.subr.mxu0 0.0
    %571 = vmatpush1.xpose.msra.mxu0 0.0
    %572 = vmatprep.subr.mxu0 0.0
    %573 = vmatpush1.xpose.msra.mxu0 0.0
    %574 = vmatprep.subr.mxu0 0.0
    %575 = vmatpush1.xpose.msra.mxu0 0.0
    %576 = vmatprep.subr.mxu0 0.0
    %577 = vmatpush1.xpose.msra.mxu0 0.0
    %578 = vmatprep.subr.mxu0 0.0
    %579 = vmatpush1.xpose.msra.mxu0 0.0
    %580 = vmatprep.subr.mxu0 0.0
    %581 = vmatpush1.xpose.msra.mxu0 0.0
    %582 = vmatprep.subr.mxu0 0.0
    %583 = vmatpush1.xpose.msra.mxu0 0.0
    %584 = vmatprep.subr.mxu0 0.0
    %585 = vmatpush1.xpose.msra.mxu0 0.0
    %586 = vmatprep.subr.mxu0 0.0
    %587 = vmatpush1.xpose.msra.mxu0 0.0
    %588 = vmatprep.subr.mxu0 0.0
    %589 = vmatpush1.xpose.msra.mxu0 0.0
    %590 = vmatprep.subr.mxu0 0.0
    %591 = vmatpush1.xpose.msra.mxu0 0.0
    %592 = vmatprep.subr.mxu0 0.0
    %593 = vmatpush1.xpose.msra.mxu0 0.0
    %594 = vmatprep.subr.mxu0 0.0
    %595 = vmatpush1.xpose.msra.mxu0 0.0
    %596 = vmatprep.subr.mxu0 0.0
    %597 = vmatpush1.xpose.msra.mxu0 0.0
    %598 = vmatprep.subr.mxu0 0.0
    %599 = vmatpush1.xpose.msra.mxu0 0.0
    %600 = vmatprep.subr.mxu0 0.0
    %601 = vmatpush1.xpose.msra.mxu0 0.0
    %602 = vmatprep.subr.mxu0 0.0
    %603 = vmatpush1.xpose.msra.mxu0 0.0
    %604 = vmatprep.subr.mxu0 0.0
    %605 = vmatpush1.xpose.msra.mxu0 0.0
    %606 = vmatprep.subr.mxu0 0.0
    %607 = vmatpush1.xpose.msra.mxu0 0.0
    %608 = vmatprep.subr.mxu0 0.0
    %609 = vmatpush1.xpose.msra.mxu0 0.0
    %610 = vmatprep.mubr.f32.mxu0 0.0
    %611 = vmatmul.mubr.f32.gmra.mrb[0].mxu0 %v473
    %v612 = vpop.f32.mrb[0].mxu0
    %v613 = vadd.f32 0.0, %v612
    %v614 = vpop.f32.mrb[0].mxu0
    %615 = vdwg.mxu0
    %vm616 = vcmp.eq.f32.partialorder %v613, 0.0
    %v618 = vsel %vm109, %v183, 0
    %v621 = vsel %vm109, %v274, 0
    %v624 = vsel %vm109, %v279, 0
    %626 = vmatprep.subr.mxu0 0.0
    %627 = vmatpush1.xpose.msra.mxu0 %v621
    %628 = vmatprep.subr.mxu0 0.0
    %629 = vmatpush1.xpose.msra.mxu0 %v624
    %630 = vmatprep.subr.mxu0 0.0
    %631 = vmatpush1.xpose.msra.mxu0 0.0
    %632 = vmatprep.subr.mxu0 0.0
    %633 = vmatpush1.xpose.msra.mxu0 0.0
    %634 = vmatprep.subr.mxu0 0.0
    %635 = vmatpush1.xpose.msra.mxu0 0.0
    %636 = vmatprep.subr.mxu0 0.0
    %637 = vmatpush1.xpose.msra.mxu0 0.0
    %638 = vmatprep.subr.mxu0 0.0
    %639 = vmatpush1.xpose.msra.mxu0 0.0
    %640 = vmatprep.subr.mxu0 0.0
    %641 = vmatpush1.xpose.msra.mxu0 0.0
    %642 = vmatprep.subr.mxu0 0.0
    %643 = vmatpush1.xpose.msra.mxu0 0.0
    %644 = vmatprep.subr.mxu0 0.0
    %645 = vmatpush1.xpose.msra.mxu0 0.0
    %646 = vmatprep.subr.mxu0 0.0
    %647 = vmatpush1.xpose.msra.mxu0 0.0
    %648 = vmatprep.subr.mxu0 0.0
    %649 = vmatpush1.xpose.msra.mxu0 0.0
    %650 = vmatprep.subr.mxu0 0.0
    %651 = vmatpush1.xpose.msra.mxu0 0.0
    %652 = vmatprep.subr.mxu0 0.0
    %653 = vmatpush1.xpose.msra.mxu0 0.0
    %654 = vmatprep.subr.mxu0 0.0
    %655 = vmatpush1.xpose.msra.mxu0 0.0
    %656 = vmatprep.subr.mxu0 0.0
    %657 = vmatpush1.xpose.msra.mxu0 0.0
    %658 = vmatprep.subr.mxu0 0.0
    %659 = vmatpush1.xpose.msra.mxu0 0.0
    %660 = vmatprep.subr.mxu0 0.0
    %661 = vmatpush1.xpose.msra.mxu0 0.0
    %662 = vmatprep.subr.mxu0 0.0
    %663 = vmatpush1.xpose.msra.mxu0 0.0
    %664 = vmatprep.subr.mxu0 0.0
    %665 = vmatpush1.xpose.msra.mxu0 0.0
    %666 = vmatprep.subr.mxu0 0.0
    %667 = vmatpush1.xpose.msra.mxu0 0.0
    %668 = vmatprep.subr.mxu0 0.0
    %669 = vmatpush1.xpose.msra.mxu0 0.0
    %670 = vmatprep.subr.mxu0 0.0
    %671 = vmatpush1.xpose.msra.mxu0 0.0
    %672 = vmatprep.subr.mxu0 0.0
    %673 = vmatpush1.xpose.msra.mxu0 0.0
    %674 = vmatprep.subr.mxu0 0.0
    %675 = vmatpush1.xpose.msra.mxu0 0.0
    %676 = vmatprep.subr.mxu0 0.0
    %677 = vmatpush1.xpose.msra.mxu0 0.0
    %678 = vmatprep.subr.mxu0 0.0
    %679 = vmatpush1.xpose.msra.mxu0 0.0
    %680 = vmatprep.subr.mxu0 0.0
    %681 = vmatpush1.xpose.msra.mxu0 0.0
    %682 = vmatprep.subr.mxu0 0.0
    %683 = vmatpush1.xpose.msra.mxu0 0.0
    %684 = vmatprep.subr.mxu0 0.0
    %685 = vmatpush1.xpose.msra.mxu0 0.0
    %686 = vmatprep.subr.mxu0 0.0
    %687 = vmatpush1.xpose.msra.mxu0 0.0
    %688 = vmatprep.subr.mxu0 0.0
    %689 = vmatpush1.xpose.msra.mxu0 0.0
    %690 = vmatprep.mubr.f32.mxu0 0.0
    %691 = vmatmul.mubr.f32.gmra.mrb[0].mxu0 %v618
    %v692 = vpop.f32.mrb[0].mxu0
    %v693 = vadd.f32 0.0, %v692
    %v694 = vpop.f32.mrb[0].mxu0
    %695 = vdwg.mxu0
    %v696 = vmul.f32 %v693, 0.17677669
    %697 = vmatprep.subr.mxu0 0.0
    %698 = vmatpush1.xpose.msra.mxu0 %v618
    %699 = vmatprep.subr.mxu0 0.0
    %700 = vmatpush1.xpose.msra.mxu0 0.0
    %701 = vmatprep.subr.mxu0 0.0
    %702 = vmatpush1.xpose.msra.mxu0 0.0
    %703 = vmatprep.subr.mxu0 0.0
    %704 = vmatpush1.xpose.msra.mxu0 0.0
    %705 = vmatprep.subr.mxu0 0.0
    %706 = vmatpush1.xpose.msra.mxu0 0.0
    %707 = vmatprep.subr.mxu0 0.0
    %708 = vmatpush1.xpose.msra.mxu0 0.0
    %709 = vmatprep.subr.mxu0 0.0
    %710 = vmatpush1.xpose.msra.mxu0 0.0
    %711 = vmatprep.subr.mxu0 0.0
    %712 = vmatpush1.xpose.msra.mxu0 0.0
    %713 = vmatprep.subr.mxu0 0.0
    %714 = vmatpush1.xpose.msra.mxu0 0.0
    %715 = vmatprep.subr.mxu0 0.0
    %716 = vmatpush1.xpose.msra.mxu0 0.0
    %717 = vmatprep.subr.mxu0 0.0
    %718 = vmatpush1.xpose.msra.mxu0 0.0
    %719 = vmatprep.subr.mxu0 0.0
    %720 = vmatpush1.xpose.msra.mxu0 0.0
    %721 = vmatprep.subr.mxu0 0.0
    %722 = vmatpush1.xpose.msra.mxu0 0.0
    %723 = vmatprep.subr.mxu0 0.0
    %724 = vmatpush1.xpose.msra.mxu0 0.0
    %725 = vmatprep.subr.mxu0 0.0
    %726 = vmatpush1.xpose.msra.mxu0 0.0
    %727 = vmatprep.subr.mxu0 0.0
    %728 = vmatpush1.xpose.msra.mxu0 0.0
    %729 = vmatprep.subr.mxu0 0.0
    %730 = vmatpush1.xpose.msra.mxu0 0.0
    %731 = vmatprep.subr.mxu0 0.0
    %732 = vmatpush1.xpose.msra.mxu0 0.0
    %733 = vmatprep.subr.mxu0 0.0
    %734 = vmatpush1.xpose.msra.mxu0 0.0
    %735 = vmatprep.subr.mxu0 0.0
    %736 = vmatpush1.xpose.msra.mxu0 0.0
    %737 = vmatprep.subr.mxu0 0.0
    %738 = vmatpush1.xpose.msra.mxu0 0.0
    %739 = vmatprep.subr.mxu0 0.0
    %740 = vmatpush1.xpose.msra.mxu0 0.0
    %741 = vmatprep.subr.mxu0 0.0
    %742 = vmatpush1.xpose.msra.mxu0 0.0
    %743 = vmatprep.subr.mxu0 0.0
    %744 = vmatpush1.xpose.msra.mxu0 0.0
    %745 = vmatprep.subr.mxu0 0.0
    %746 = vmatpush1.xpose.msra.mxu0 0.0
    %747 = vmatprep.subr.mxu0 0.0
    %748 = vmatpush1.xpose.msra.mxu0 0.0
    %749 = vmatprep.subr.mxu0 0.0
    %750 = vmatpush1.xpose.msra.mxu0 0.0
    %751 = vmatprep.subr.mxu0 0.0
    %752 = vmatpush1.xpose.msra.mxu0 0.0
    %753 = vmatprep.subr.mxu0 0.0
    %754 = vmatpush1.xpose.msra.mxu0 0.0
    %755 = vmatprep.subr.mxu0 0.0
    %756 = vmatpush1.xpose.msra.mxu0 0.0
    %757 = vmatprep.subr.mxu0 0.0
    %758 = vmatpush1.xpose.msra.mxu0 0.0
    %759 = vmatprep.subr.mxu0 0.0
    %760 = vmatpush1.xpose.msra.mxu0 0.0
    %761 = vmatprep.mubr.f32.mxu0 0.0
    %762 = vmatmul.mubr.f32.gmra.mrb[0].mxu0 %v621
    %v763 = vpop.f32.mrb[0].mxu0
    %v764 = vadd.f32 0.0, %v763
    %v765 = vpop.f32.mrb[0].mxu0
    %766 = vmatprep.mubr.f32.mxu0 0.0
    %767 = vmatmul.mubr.f32.gmra.mrb[0].mxu0 %v624
    %v768 = vpop.f32.mrb[0].mxu0
    %v769 = vadd.f32 0.0, %v768
    %v770 = vpop.f32.mrb[0].mxu0
    %771 = vdwg.mxu0
    %v772 = vmul.f32 %v764, 0.17677669
    %v773 = vmul.f32 %v769, 0.17677669
    %v774 = vsel %vm545, 1, 0
    %v775 = vlaneseq
    %v776 = vshrl.u32 %v775, 7
    %v777 = vsub.s32 0, %v776
    %v778 = vrot.slane %v774, %v777
    %vm779 = vcmp.eq.s32.totalorder %v778, 1
    %v780 = vsel %vm779, -1e+30, %v696
    %vm781 = vcmask 130048
    %v782 = vsel %vm781, %v780, -inf
    %783 = vmax.xlane.f32.xlu0 %v782
    %v784 = vpop.xlane.xlu0 %783
    %v785 = vsub.f32 %v780, %v784
    %v786 = vmul.f32 %v785, 1.442695
    %v787 = vpow.pop %v786
    %v788 = vsel %vm781, %v787, 0.0
    %789 = vadd.xlane.f32.xlu0 %v788
    %v790 = vpop.xlane.xlu0 %789
    %v791 = vrcp.pop %v790
    %v792 = vmul.f32 %v790, %v791
    %v793 = vsub.f32 2.0, %v792
    %v794 = vmul.f32 %v791, %v793
    %v795 = vmul.f32 %v787, %v794
    %v796 = vsel %vm463, 1, 0
    %vm797 = vcmp.eq.s32.totalorder %v796, 1
    %v798 = vsel %vm797, 0.0, %v795
    %v799 = vsel %vm616, 1, 0
    %v800 = vlaneseq
    %v801 = vshrl.u32 %v800, 7
    %v802 = vsub.s32 0, %v801
    %v803 = vrot.slane %v799, %v802
    %vm804 = vcmp.eq.s32.totalorder %v803, 1
    %v805 = vsel %vm804, -1e+30, %v772
    %v806 = vsel %vm804, -1e+30, %v773
    %vm807 = vcmask 64512
    %v808 = vsel %vm807, %v805, -inf
    %809 = vmax.xlane.f32.xlu0 %v808
    %v810 = vpop.xlane.xlu0 %809
    %v811 = vsel %vm807, %v806, -inf
    %812 = vmax.xlane.f32.xlu0 %v811
    %v813 = vpop.xlane.xlu0 %812
    %v814 = vsub.f32 %v805, %v810
    %v815 = vsub.f32 %v806, %v813
    %v816 = vmul.f32 %v814, 1.442695
    %v817 = vpow.pop %v816
    %v818 = vmul.f32 %v815, 1.442695
    %v819 = vpow.pop %v818
    %v820 = vsel %vm807, %v817, 0.0
    %821 = vadd.xlane.f32.xlu0 %v820
    %v822 = vpop.xlane.xlu0 %821
    %v823 = vsel %vm807, %v819, 0.0
    %824 = vadd.xlane.f32.xlu0 %v823
    %v825 = vpop.xlane.xlu0 %824
    %v826 = vrcp.pop %v822
    %v827 = vrcp.pop %v825
    %v828 = vmul.f32 %v822, %v826
    %v829 = vmul.f32 %v825, %v827
    %v830 = vsub.f32 2.0, %v828
    %v831 = vsub.f32 2.0, %v829
    %v832 = vmul.f32 %v826, %v830
    %v833 = vmul.f32 %v827, %v831
    %v834 = vmul.f32 %v817, %v832
    %v835 = vmul.f32 %v819, %v833
    %v836 = vsel %vm470, 1, 0
    %v837 = vsel %vm471, 1, 0
    %vm838 = vcmp.eq.s32.totalorder %v836, 1
    %vm839 = vcmp.eq.s32.totalorder %v837, 1
    %v840 = vsel %vm838, 0.0, %v834
    %v841 = vsel %vm839, 0.0, %v835
    %v842 = vld [vmem:[#allocation9] sm:$0xff]
    %v843 = vmul.f32 %v842, 0.17677669
    %v844 = vsel %vm779, -1e+30, %v843
    %v845 = vsel %vm781, %v844, -inf
    %846 = vmax.xlane.f32.xlu0 %v845
    %v847 = vpop.xlane.xlu0 %846
    %v848 = vsub.f32 %v844, %v847
    %v849 = vmul.f32 %v848, 1.442695
    %v850 = vpow.pop %v849
    %v851 = vsel %vm781, %v850, 0.0
    %852 = vadd.xlane.f32.xlu0 %v851
    %v853 = vpop.xlane.xlu0 %852
    %v854 = vrcp.pop %v853
    %v855 = vmul.f32 %v853, %v854
    %v856 = vsub.f32 2.0, %v855
    %v857 = vmul.f32 %v854, %v856
    %v858 = vmul.f32 %v850, %v857
    %v859 = vsel %vm797, 0.0, %v858
    %v860 = vld [vmem:[%s7] sm:$0xff]
    %v861 = vld [vmem:[%s7 + $0x8] sm:$0xff]
    %v862 = vmul.f32 %v860, 0.17677669
    %v863 = vmul.f32 %v861, 0.17677669
    %v864 = vsel %vm804, -1e+30, %v862
    %v865 = vsel %vm804, -1e+30, %v863
    %v866 = vsel %vm807, %v864, -inf
    %867 = vmax.xlane.f32.xlu0 %v866
    %v868 = vpop.xlane.xlu0 %867
    %v869 = vsel %vm807, %v865, -inf
    %870 = vmax.xlane.f32.xlu0 %v869
    %v871 = vpop.xlane.xlu0 %870
    %v872 = vsub.f32 %v864, %v868
    %v873 = vsub.f32 %v865, %v871
    %v874 = vmul.f32 %v872, 1.442695
    %v875 = vpow.pop %v874
    %v876 = vmul.f32 %v873, 1.442695
    %v877 = vpow.pop %v876
    %v878 = vsel %vm807, %v875, 0.0
    %879 = vadd.xlane.f32.xlu0 %v878
    %v880 = vpop.xlane.xlu0 %879
    %v881 = vsel %vm807, %v877, 0.0
    %882 = vadd.xlane.f32.xlu0 %v881
    %v883 = vpop.xlane.xlu0 %882
    %v884 = vrcp.pop %v880
    %v885 = vrcp.pop %v883
    %v886 = vmul.f32 %v880, %v884
    %v887 = vmul.f32 %v883, %v885
    %v888 = vsub.f32 2.0, %v886
    %v889 = vsub.f32 2.0, %v887
    %v890 = vmul.f32 %v884, %v888
    %v891 = vmul.f32 %v885, %v889
    %v892 = vmul.f32 %v875, %v890
    %v893 = vmul.f32 %v877, %v891
    %v894 = vsel %vm838, 0.0, %v892
    %v895 = vsel %vm839, 0.0, %v893
    %v897 = vsel %vm781, %v798, 0
    %v900 = vsel %vm781, %v859, 0
    %902 = vmatprep.subr.mxu0 0.0
    %903 = vmatpush1.msra.mxu0 %v442
    %904 = vmatprep.subr.mxu0 0.0
    %905 = vmatpush1.msra.mxu0 %v447
    %906 = vmatprep.subr.mxu0 0.0
    %907 = vmatpush1.msra.mxu0 0.0
    %908 = vmatprep.subr.mxu0 0.0
    %909 = vmatpush1.msra.mxu0 0.0
    %910 = vmatprep.subr.mxu0 0.0
    %911 = vmatpush1.msra.mxu0 0.0
    %912 = vmatprep.subr.mxu0 0.0
    %913 = vmatpush1.msra.mxu0 0.0
    %914 = vmatprep.subr.mxu0 0.0
    %915 = vmatpush1.msra.mxu0 0.0
    %916 = vmatprep.subr.mxu0 0.0
    %917 = vmatpush1.msra.mxu0 0.0
    %918 = vmatprep.subr.mxu0 0.0
    %919 = vmatpush1.msra.mxu0 0.0
    %920 = vmatprep.subr.mxu0 0.0
    %921 = vmatpush1.msra.mxu0 0.0
    %922 = vmatprep.subr.mxu0 0.0
    %923 = vmatpush1.msra.mxu0 0.0
    %924 = vmatprep.subr.mxu0 0.0
    %925 = vmatpush1.msra.mxu0 0.0
    %926 = vmatprep.subr.mxu0 0.0
    %927 = vmatpush1.msra.mxu0 0.0
    %928 = vmatprep.subr.mxu0 0.0
    %929 = vmatpush1.msra.mxu0 0.0
    %930 = vmatprep.subr.mxu0 0.0
    %931 = vmatpush1.msra.mxu0 0.0
    %932 = vmatprep.subr.mxu0 0.0
    %933 = vmatpush1.msra.mxu0 0.0
    %934 = vmatprep.subr.mxu0 0.0
    %935 = vmatpush1.msra.mxu0 0.0
    %936 = vmatprep.subr.mxu0 0.0
    %937 = vmatpush1.msra.mxu0 0.0
    %938 = vmatprep.subr.mxu0 0.0
    %939 = vmatpush1.msra.mxu0 0.0
    %940 = vmatprep.subr.mxu0 0.0
    %941 = vmatpush1.msra.mxu0 0.0
    %942 = vmatprep.subr.mxu0 0.0
    %943 = vmatpush1.msra.mxu0 0.0
    %944 = vmatprep.subr.mxu0 0.0
    %945 = vmatpush1.msra.mxu0 0.0
    %946 = vmatprep.subr.mxu0 0.0
    %947 = vmatpush1.msra.mxu0 0.0
    %948 = vmatprep.subr.mxu0 0.0
    %949 = vmatpush1.msra.mxu0 0.0
    %950 = vmatprep.subr.mxu0 0.0
    %951 = vmatpush1.msra.mxu0 0.0
    %952 = vmatprep.subr.mxu0 0.0
    %953 = vmatpush1.msra.mxu0 0.0
    %954 = vmatprep.subr.mxu0 0.0
    %955 = vmatpush1.msra.mxu0 0.0
    %956 = vmatprep.subr.mxu0 0.0
    %957 = vmatpush1.msra.mxu0 0.0
    %958 = vmatprep.subr.mxu0 0.0
    %959 = vmatpush1.msra.mxu0 0.0
    %960 = vmatprep.subr.mxu0 0.0
    %961 = vmatpush1.msra.mxu0 0.0
    %962 = vmatprep.subr.mxu0 0.0
    %963 = vmatpush1.msra.mxu0 0.0
    %964 = vmatprep.subr.mxu0 0.0
    %965 = vmatpush1.msra.mxu0 0.0
    %966 = vmatprep.mubr.f32.mxu0 0.0
    %967 = vmatmul.mubr.f32.gmra.mrb[0].mxu0 %v897
    %v968 = vpop.f32.mrb[0].mxu0
    %v969 = vadd.f32 0.0, %v968
    %v970 = vpop.f32.mrb[0].mxu0
    %971 = vmatprep.mubr.f32.mxu0 0.0
    %972 = vmatmul.mubr.f32.gmra.mrb[0].mxu0 %v900
    %v973 = vpop.f32.mrb[0].mxu0
    %v974 = vadd.f32 0.0, %v973
    %v975 = vpop.f32.mrb[0].mxu0
    %976 = vdwg.mxu0
    %v978 = vsel %vm807, %v840, 0
    %v981 = vsel %vm807, %v841, 0
    %v984 = vsel %vm807, %v894, 0
    %v987 = vsel %vm807, %v895, 0
    %989 = vmatprep.subr.mxu0 0.0
    %990 = vmatpush1.msra.mxu0 %v363
    %991 = vmatprep.subr.mxu0 0.0
    %992 = vmatpush1.msra.mxu0 0.0
    %993 = vmatprep.subr.mxu0 0.0
    %994 = vmatpush1.msra.mxu0 0.0
    %995 = vmatprep.subr.mxu0 0.0
    %996 = vmatpush1.msra.mxu0 0.0
    %997 = vmatprep.subr.mxu0 0.0
    %998 = vmatpush1.msra.mxu0 0.0
    %999 = vmatprep.subr.mxu0 0.0
    %1000 = vmatpush1.msra.mxu0 0.0
    %1001 = vmatprep.subr.mxu0 0.0
    %1002 = vmatpush1.msra.mxu0 0.0
    %1003 = vmatprep.subr.mxu0 0.0
    %1004 = vmatpush1.msra.mxu0 0.0
    %1005 = vmatprep.subr.mxu0 0.0
    %1006 = vmatpush1.msra.mxu0 0.0
    %1007 = vmatprep.subr.mxu0 0.0
    %1008 = vmatpush1.msra.mxu0 0.0
    %1009 = vmatprep.subr.mxu0 0.0
    %1010 = vmatpush1.msra.mxu0 0.0
    %1011 = vmatprep.subr.mxu0 0.0
    %1012 = vmatpush1.msra.mxu0 0.0
    %1013 = vmatprep.subr.mxu0 0.0
    %1014 = vmatpush1.msra.mxu0 0.0
    %1015 = vmatprep.subr.mxu0 0.0
    %1016 = vmatpush1.msra.mxu0 0.0
    %1017 = vmatprep.subr.mxu0 0.0
    %1018 = vmatpush1.msra.mxu0 0.0
    %1019 = vmatprep.subr.mxu0 0.0
    %1020 = vmatpush1.msra.mxu0 0.0
    %1021 = vmatprep.subr.mxu0 0.0
    %1022 = vmatpush1.msra.mxu0 0.0
    %1023 = vmatprep.subr.mxu0 0.0
    %1024 = vmatpush1.msra.mxu0 0.0
    %1025 = vmatprep.subr.mxu0 0.0
    %1026 = vmatpush1.msra.mxu0 0.0
    %1027 = vmatprep.subr.mxu0 0.0
    %1028 = vmatpush1.msra.mxu0 0.0
    %1029 = vmatprep.subr.mxu0 0.0
    %1030 = vmatpush1.msra.mxu0 0.0
    %1031 = vmatprep.subr.mxu0 0.0
    %1032 = vmatpush1.msra.mxu0 0.0
    %1033 = vmatprep.subr.mxu0 0.0
    %1034 = vmatpush1.msra.mxu0 0.0
    %1035 = vmatprep.subr.mxu0 0.0
    %1036 = vmatpush1.msra.mxu0 0.0
    %1037 = vmatprep.subr.mxu0 0.0
    %1038 = vmatpush1.msra.mxu0 0.0
    %1039 = vmatprep.subr.mxu0 0.0
    %1040 = vmatpush1.msra.mxu0 0.0
    %1041 = vmatprep.subr.mxu0 0.0
    %1042 = vmatpush1.msra.mxu0 0.0
    %1043 = vmatprep.subr.mxu0 0.0
    %1044 = vmatpush1.msra.mxu0 0.0
    %1045 = vmatprep.subr.mxu0 0.0
    %1046 = vmatpush1.msra.mxu0 0.0
    %1047 = vmatprep.subr.mxu0 0.0
    %1048 = vmatpush1.msra.mxu0 0.0
    %1049 = vmatprep.subr.mxu0 0.0
    %1050 = vmatpush1.msra.mxu0 0.0
    %1051 = vmatprep.subr.mxu0 0.0
    %1052 = vmatpush1.msra.mxu0 0.0
    %1053 = vmatprep.mubr.f32.mxu0 0.0
    %1054 = vmatmul.mubr.f32.gmra.mrb[0].mxu0 %v978
    %v1055 = vpop.f32.mrb[0].mxu0
    %v1056 = vadd.f32 0.0, %v1055
    %v1057 = vpop.f32.mrb[0].mxu0
    %1058 = vmatprep.mubr.f32.mxu0 0.0
    %1059 = vmatmul.mubr.f32.gmra.mrb[0].mxu0 %v981
    %v1060 = vpop.f32.mrb[0].mxu0
    %v1061 = vadd.f32 0.0, %v1060
    %v1062 = vpop.f32.mrb[0].mxu0
    %1063 = vmatprep.mubr.f32.mxu0 0.0
    %1064 = vmatmul.mubr.f32.gmra.mrb[0].mxu0 %v984
    %v1065 = vpop.f32.mrb[0].mxu0
    %v1066 = vadd.f32 0.0, %v1065
    %v1067 = vpop.f32.mrb[0].mxu0
    %1068 = vmatprep.mubr.f32.mxu0 0.0
    %1069 = vmatmul.mubr.f32.gmra.mrb[0].mxu0 %v987
    %v1070 = vpop.f32.mrb[0].mxu0
    %v1071 = vadd.f32 0.0, %v1070
    %v1072 = vpop.f32.mrb[0].mxu0
    %1073 = vdwg.mxu0
    %v1074 = vadd.f32 %v969, %v99
    %v1075 = vsel %vm109, %v1074, 0.0
    %1076 = vadd.xlane.f32.xlu0 %v1075
    %v1077 = vpop.xlane.xlu0 %1076
    %v1078 = vrcp.pop 32.0
    %v1079 = vmul.f32 %v1077, %v1078
    %v1080 = vsub.f32 %v1074, %v1079
    %v1081 = vmul.f32 %v1080, %v1080
    %v1082 = vsel %vm109, %v1081, 0.0
    %1083 = vadd.xlane.f32.xlu0 %v1082
    %v1084 = vpop.xlane.xlu0 %1083
    %v1085 = vmul.f32 %v1084, %v1078
    %v1086 = vadd.f32 %v1085, 1e-05
    %v1087 = vrsqrt.pop %v1086
    %v1088 = vmul.f32 %v1080, %v1087
    %v1089 = vadd.f32 %v974, %v99
    %v1090 = vsel %vm109, %v1089, 0.0
    %1091 = vadd.xlane.f32.xlu0 %v1090
    %v1092 = vpop.xlane.xlu0 %1091
    %v1093 = vmul.f32 %v1092, %v1078
    %v1094 = vsub.f32 %v1089, %v1093
    %v1095 = vmul.f32 %v1094, %v1094
    %v1096 = vsel %vm109, %v1095, 0.0
    %1097 = vadd.xlane.f32.xlu0 %v1096
    %v1098 = vpop.xlane.xlu0 %1097
    %v1099 = vmul.f32 %v1098, %v1078
    %v1100 = vadd.f32 %v1099, 1e-05
    %v1101 = vrsqrt.pop %v1100
    %v1102 = vmul.f32 %v1094, %v1101
    %1104 = vrot.lane.b32.xlu0 %v1102, 32
    %v1105 = vpop.permute.xlu0 %1104
    %v1107 = vsel %vm109, %v1088, %v1105
    %vm1108 = vcmask 523264
    %1109 = vst.msk [vmem:[%s8] sm:$0xff] %vm1108, %v1107
    %v1110 = vadd.f32 %v1056, %v101
    %v1111 = vadd.f32 %v1061, %v102
    %v1112 = vsel %vm109, %v1110, 0.0
    %1113 = vadd.xlane.f32.xlu0 %v1112
    %v1114 = vpop.xlane.xlu0 %1113
    %v1115 = vsel %vm109, %v1111, 0.0
    %1116 = vadd.xlane.f32.xlu0 %v1115
    %v1117 = vpop.xlane.xlu0 %1116
    %v1118 = vmul.f32 %v1114, %v1078
    %v1119 = vmul.f32 %v1117, %v1078
    %v1120 = vsub.f32 %v1110, %v1118
    %v1121 = vsub.f32 %v1111, %v1119
    %v1122 = vmul.f32 %v1120, %v1120
    %v1123 = vmul.f32 %v1121, %v1121
    %v1124 = vsel %vm109, %v1122, 0.0
    %1125 = vadd.xlane.f32.xlu0 %v1124
    %v1126 = vpop.xlane.xlu0 %1125
    %v1127 = vsel %vm109, %v1123, 0.0
    %1128 = vadd.xlane.f32.xlu0 %v1127
    %v1129 = vpop.xlane.xlu0 %1128
    %v1130 = vmul.f32 %v1126, %v1078
    %v1131 = vmul.f32 %v1129, %v1078
    %v1132 = vadd.f32 %v1130, 1e-05
    %v1133 = vadd.f32 %v1131, 1e-05
    %v1134 = vrsqrt.pop %v1132
    %v1135 = vrsqrt.pop %v1133
    %v1136 = vmul.f32 %v1120, %v1134
    %v1137 = vmul.f32 %v1121, %v1135
    %v1138 = vadd.f32 %v1066, %v101
    %v1139 = vadd.f32 %v1071, %v102
    %v1140 = vsel %vm109, %v1138, 0.0
    %1141 = vadd.xlane.f32.xlu0 %v1140
    %v1142 = vpop.xlane.xlu0 %1141
    %v1143 = vsel %vm109, %v1139, 0.0
    %1144 = vadd.xlane.f32.xlu0 %v1143
    %v1145 = vpop.xlane.xlu0 %1144
    %v1146 = vmul.f32 %v1142, %v1078
    %v1147 = vmul.f32 %v1145, %v1078
    %v1148 = vsub.f32 %v1138, %v1146
    %v1149 = vsub.f32 %v1139, %v1147
    %v1150 = vmul.f32 %v1148, %v1148
    %v1151 = vmul.f32 %v1149, %v1149
    %v1152 = vsel %vm109, %v1150, 0.0
    %1153 = vadd.xlane.f32.xlu0 %v1152
    %v1154 = vpop.xlane.xlu0 %1153
    %v1155 = vsel %vm109, %v1151, 0.0
    %1156 = vadd.xlane.f32.xlu0 %v1155
    %v1157 = vpop.xlane.xlu0 %1156
    %v1158 = vmul.f32 %v1154, %v1078
    %v1159 = vmul.f32 %v1157, %v1078
    %v1160 = vadd.f32 %v1158, 1e-05
    %v1161 = vadd.f32 %v1159, 1e-05
    %v1162 = vrsqrt.pop %v1160
    %v1163 = vrsqrt.pop %v1161
    %v1164 = vmul.f32 %v1148, %v1162
    %v1165 = vmul.f32 %v1149, %v1163
    %1168 = vrot.lane.b32.xlu0 %v1164, 32
    %v1169 = vpop.permute.xlu0 %1168
    %1170 = vrot.lane.b32.xlu0 %v1165, 32
    %v1171 = vpop.permute.xlu0 %1170
    %v1174 = vsel %vm109, %v1136, %v1169
    %v1175 = vsel %vm109, %v1137, %v1171
    %1176 = vst.msk [vmem:[%s9] sm:$0xff] %vm1108, %v1174
    %1177 = vst.msk [vmem:[%s9 + $0x8] sm:$0xff] %vm1108, %v1175
    %v1178 = vsel %vm109, %v100, 0.0
    %1179 = vadd.xlane.f32.xlu0 %v1178
    %v1180 = vpop.xlane.xlu0 %1179
    %vm1181 = vcmp.eq.f32.partialorder %v1180, 0.0
    %v1182 = vsel %vm109, %v103, 0.0
    %1183 = vadd.xlane.f32.xlu0 %v1182
    %v1184 = vpop.xlane.xlu0 %1183
    %v1185 = vsel %vm109, %v104, 0.0
    %1186 = vadd.xlane.f32.xlu0 %v1185
    %v1187 = vpop.xlane.xlu0 %1186
    %vm1188 = vcmp.eq.f32.partialorder %v1184, 0.0
    %vm1189 = vcmp.eq.f32.partialorder %v1187, 0.0
    %1190 = vmatprep.subr.mxu0 0.0
    %1191 = vmatpush1.xpose.msra.mxu0 %v202
    %1192 = vmatprep.subr.mxu0 0.0
    %1193 = vmatpush1.xpose.msra.mxu0 %v205
    %1194 = vmatprep.subr.mxu0 0.0
    %1195 = vmatpush1.xpose.msra.mxu0 0.0
    %1196 = vmatprep.subr.mxu0 0.0
    %1197 = vmatpush1.xpose.msra.mxu0 0.0
    %1198 = vmatprep.subr.mxu0 0.0
    %1199 = vmatpush1.xpose.msra.mxu0 0.0
    %1200 = vmatprep.subr.mxu0 0.0
    %1201 = vmatpush1.xpose.msra.mxu0 0.0
    %1202 = vmatprep.subr.mxu0 0.0
    %1203 = vmatpush1.xpose.msra.mxu0 0.0
    %1204 = vmatprep.subr.mxu0 0.0
    %1205 = vmatpush1.xpose.msra.mxu0 0.0
    %1206 = vmatprep.subr.mxu0 0.0
    %1207 = vmatpush1.xpose.msra.mxu0 0.0
    %1208 = vmatprep.subr.mxu0 0.0
    %1209 = vmatpush1.xpose.msra.mxu0 0.0
    %1210 = vmatprep.subr.mxu0 0.0
    %1211 = vmatpush1.xpose.msra.mxu0 0.0
    %1212 = vmatprep.subr.mxu0 0.0
    %1213 = vmatpush1.xpose.msra.mxu0 0.0
    %1214 = vmatprep.subr.mxu0 0.0
    %1215 = vmatpush1.xpose.msra.mxu0 0.0
    %1216 = vmatprep.subr.mxu0 0.0
    %1217 = vmatpush1.xpose.msra.mxu0 0.0
    %1218 = vmatprep.subr.mxu0 0.0
    %1219 = vmatpush1.xpose.msra.mxu0 0.0
    %1220 = vmatprep.subr.mxu0 0.0
    %1221 = vmatpush1.xpose.msra.mxu0 0.0
    %1222 = vmatprep.subr.mxu0 0.0
    %1223 = vmatpush1.xpose.msra.mxu0 0.0
    %1224 = vmatprep.subr.mxu0 0.0
    %1225 = vmatpush1.xpose.msra.mxu0 0.0
    %1226 = vmatprep.subr.mxu0 0.0
    %1227 = vmatpush1.xpose.msra.mxu0 0.0
    %1228 = vmatprep.subr.mxu0 0.0
    %1229 = vmatpush1.xpose.msra.mxu0 0.0
    %1230 = vmatprep.subr.mxu0 0.0
    %1231 = vmatpush1.xpose.msra.mxu0 0.0
    %1232 = vmatprep.subr.mxu0 0.0
    %1233 = vmatpush1.xpose.msra.mxu0 0.0
    %1234 = vmatprep.subr.mxu0 0.0
    %1235 = vmatpush1.xpose.msra.mxu0 0.0
    %1236 = vmatprep.subr.mxu0 0.0
    %1237 = vmatpush1.xpose.msra.mxu0 0.0
    %1238 = vmatprep.subr.mxu0 0.0
    %1239 = vmatpush1.xpose.msra.mxu0 0.0
    %1240 = vmatprep.subr.mxu0 0.0
    %1241 = vmatpush1.xpose.msra.mxu0 0.0
    %1242 = vmatprep.subr.mxu0 0.0
    %1243 = vmatpush1.xpose.msra.mxu0 0.0
    %1244 = vmatprep.subr.mxu0 0.0
    %1245 = vmatpush1.xpose.msra.mxu0 0.0
    %1246 = vmatprep.subr.mxu0 0.0
    %1247 = vmatpush1.xpose.msra.mxu0 0.0
    %1248 = vmatprep.subr.mxu0 0.0
    %1249 = vmatpush1.xpose.msra.mxu0 0.0
    %1250 = vmatprep.subr.mxu0 0.0
    %1251 = vmatpush1.xpose.msra.mxu0 0.0
    %1252 = vmatprep.subr.mxu0 0.0
    %1253 = vmatpush1.xpose.msra.mxu0 0.0
    %1254 = vmatprep.mubr.f32.mxu0 0.0
    %1255 = vmatmul.mubr.f32.gmra.mrb[0].mxu0 %v473
    %v1256 = vpop.f32.mrb[0].mxu0
    %v1257 = vadd.f32 0.0, %v1256
    %v1258 = vpop.f32.mrb[0].mxu0
    %1259 = vdwg.mxu0
    %vm1260 = vcmp.eq.f32.partialorder %v1257, 0.0
    %1261 = vmatprep.subr.mxu0 0.0
    %1262 = vmatpush1.xpose.msra.mxu0 %v114
    %1263 = vmatprep.subr.mxu0 0.0
    %1264 = vmatpush1.xpose.msra.mxu0 0.0
    %1265 = vmatprep.subr.mxu0 0.0
    %1266 = vmatpush1.xpose.msra.mxu0 0.0
    %1267 = vmatprep.subr.mxu0 0.0
    %1268 = vmatpush1.xpose.msra.mxu0 0.0
    %1269 = vmatprep.subr.mxu0 0.0
    %1270 = vmatpush1.xpose.msra.mxu0 0.0
    %1271 = vmatprep.subr.mxu0 0.0
    %1272 = vmatpush1.xpose.msra.mxu0 0.0
    %1273 = vmatprep.subr.mxu0 0.0
    %1274 = vmatpush1.xpose.msra.mxu0 0.0
    %1275 = vmatprep.subr.mxu0 0.0
    %1276 = vmatpush1.xpose.msra.mxu0 0.0
    %1277 = vmatprep.subr.mxu0 0.0
    %1278 = vmatpush1.xpose.msra.mxu0 0.0
    %1279 = vmatprep.subr.mxu0 0.0
    %1280 = vmatpush1.xpose.msra.mxu0 0.0
    %1281 = vmatprep.subr.mxu0 0.0
    %1282 = vmatpush1.xpose.msra.mxu0 0.0
    %1283 = vmatprep.subr.mxu0 0.0
    %1284 = vmatpush1.xpose.msra.mxu0 0.0
    %1285 = vmatprep.subr.mxu0 0.0
    %1286 = vmatpush1.xpose.msra.mxu0 0.0
    %1287 = vmatprep.subr.mxu0 0.0
    %1288 = vmatpush1.xpose.msra.mxu0 0.0
    %1289 = vmatprep.subr.mxu0 0.0
    %1290 = vmatpush1.xpose.msra.mxu0 0.0
    %1291 = vmatprep.subr.mxu0 0.0
    %1292 = vmatpush1.xpose.msra.mxu0 0.0
    %1293 = vmatprep.subr.mxu0 0.0
    %1294 = vmatpush1.xpose.msra.mxu0 0.0
    %1295 = vmatprep.subr.mxu0 0.0
    %1296 = vmatpush1.xpose.msra.mxu0 0.0
    %1297 = vmatprep.subr.mxu0 0.0
    %1298 = vmatpush1.xpose.msra.mxu0 0.0
    %1299 = vmatprep.subr.mxu0 0.0
    %1300 = vmatpush1.xpose.msra.mxu0 0.0
    %1301 = vmatprep.subr.mxu0 0.0
    %1302 = vmatpush1.xpose.msra.mxu0 0.0
    %1303 = vmatprep.subr.mxu0 0.0
    %1304 = vmatpush1.xpose.msra.mxu0 0.0
    %1305 = vmatprep.subr.mxu0 0.0
    %1306 = vmatpush1.xpose.msra.mxu0 0.0
    %1307 = vmatprep.subr.mxu0 0.0
    %1308 = vmatpush1.xpose.msra.mxu0 0.0
    %1309 = vmatprep.subr.mxu0 0.0
    %1310 = vmatpush1.xpose.msra.mxu0 0.0
    %1311 = vmatprep.subr.mxu0 0.0
    %1312 = vmatpush1.xpose.msra.mxu0 0.0
    %1313 = vmatprep.subr.mxu0 0.0
    %1314 = vmatpush1.xpose.msra.mxu0 0.0
    %1315 = vmatprep.subr.mxu0 0.0
    %1316 = vmatpush1.xpose.msra.mxu0 0.0
    %1317 = vmatprep.subr.mxu0 0.0
    %1318 = vmatpush1.xpose.msra.mxu0 0.0
    %1319 = vmatprep.subr.mxu0 0.0
    %1320 = vmatpush1.xpose.msra.mxu0 0.0
    %1321 = vmatprep.subr.mxu0 0.0
    %1322 = vmatpush1.xpose.msra.mxu0 0.0
    %1323 = vmatprep.subr.mxu0 0.0
    %1324 = vmatpush1.xpose.msra.mxu0 0.0
    %1325 = vmatprep.mubr.f32.mxu0 0.0
    %1326 = vmatmul.mubr.f32.gmra.mrb[0].mxu0 %v473
    %v1327 = vpop.f32.mrb[0].mxu0
    %v1328 = vadd.f32 0.0, %v1327
    %v1329 = vpop.f32.mrb[0].mxu0
    %1330 = vdwg.mxu0
    %vm1331 = vcmp.eq.f32.partialorder %v1328, 0.0
    %v1333 = vsel %vm109, %v188, 0
    %v1336 = vsel %vm109, %v284, 0
    %v1339 = vsel %vm109, %v289, 0
    %1341 = vmatprep.subr.mxu0 0.0
    %1342 = vmatpush1.xpose.msra.mxu0 %v1336
    %1343 = vmatprep.subr.mxu0 0.0
    %1344 = vmatpush1.xpose.msra.mxu0 %v1339
    %1345 = vmatprep.subr.mxu0 0.0
    %1346 = vmatpush1.xpose.msra.mxu0 0.0
    %1347 = vmatprep.subr.mxu0 0.0
    %1348 = vmatpush1.xpose.msra.mxu0 0.0
    %1349 = vmatprep.subr.mxu0 0.0
    %1350 = vmatpush1.xpose.msra.mxu0 0.0
    %1351 = vmatprep.subr.mxu0 0.0
    %1352 = vmatpush1.xpose.msra.mxu0 0.0
    %1353 = vmatprep.subr.mxu0 0.0
    %1354 = vmatpush1.xpose.msra.mxu0 0.0
    %1355 = vmatprep.subr.mxu0 0.0
    %1356 = vmatpush1.xpose.msra.mxu0 0.0
    %1357 = vmatprep.subr.mxu0 0.0
    %1358 = vmatpush1.xpose.msra.mxu0 0.0
    %1359 = vmatprep.subr.mxu0 0.0
    %1360 = vmatpush1.xpose.msra.mxu0 0.0
    %1361 = vmatprep.subr.mxu0 0.0
    %1362 = vmatpush1.xpose.msra.mxu0 0.0
    %1363 = vmatprep.subr.mxu0 0.0
    %1364 = vmatpush1.xpose.msra.mxu0 0.0
    %1365 = vmatprep.subr.mxu0 0.0
    %1366 = vmatpush1.xpose.msra.mxu0 0.0
    %1367 = vmatprep.subr.mxu0 0.0
    %1368 = vmatpush1.xpose.msra.mxu0 0.0
    %1369 = vmatprep.subr.mxu0 0.0
    %1370 = vmatpush1.xpose.msra.mxu0 0.0
    %1371 = vmatprep.subr.mxu0 0.0
    %1372 = vmatpush1.xpose.msra.mxu0 0.0
    %1373 = vmatprep.subr.mxu0 0.0
    %1374 = vmatpush1.xpose.msra.mxu0 0.0
    %1375 = vmatprep.subr.mxu0 0.0
    %1376 = vmatpush1.xpose.msra.mxu0 0.0
    %1377 = vmatprep.subr.mxu0 0.0
    %1378 = vmatpush1.xpose.msra.mxu0 0.0
    %1379 = vmatprep.subr.mxu0 0.0
    %1380 = vmatpush1.xpose.msra.mxu0 0.0
    %1381 = vmatprep.subr.mxu0 0.0
    %1382 = vmatpush1.xpose.msra.mxu0 0.0
    %1383 = vmatprep.subr.mxu0 0.0
    %1384 = vmatpush1.xpose.msra.mxu0 0.0
    %1385 = vmatprep.subr.mxu0 0.0
    %1386 = vmatpush1.xpose.msra.mxu0 0.0
    %1387 = vmatprep.subr.mxu0 0.0
    %1388 = vmatpush1.xpose.msra.mxu0 0.0
    %1389 = vmatprep.subr.mxu0 0.0
    %1390 = vmatpush1.xpose.msra.mxu0 0.0
    %1391 = vmatprep.subr.mxu0 0.0
    %1392 = vmatpush1.xpose.msra.mxu0 0.0
    %1393 = vmatprep.subr.mxu0 0.0
    %1394 = vmatpush1.xpose.msra.mxu0 0.0
    %1395 = vmatprep.subr.mxu0 0.0
    %1396 = vmatpush1.xpose.msra.mxu0 0.0
    %1397 = vmatprep.subr.mxu0 0.0
    %1398 = vmatpush1.xpose.msra.mxu0 0.0
    %1399 = vmatprep.subr.mxu0 0.0
    %1400 = vmatpush1.xpose.msra.mxu0 0.0
    %1401 = vmatprep.subr.mxu0 0.0
    %1402 = vmatpush1.xpose.msra.mxu0 0.0
    %1403 = vmatprep.subr.mxu0 0.0
    %1404 = vmatpush1.xpose.msra.mxu0 0.0
    %1405 = vmatprep.mubr.f32.mxu0 0.0
    %1406 = vmatmul.mubr.f32.gmra.mrb[0].mxu0 %v1333
    %v1407 = vpop.f32.mrb[0].mxu0
    %v1408 = vadd.f32 0.0, %v1407
    %v1409 = vpop.f32.mrb[0].mxu0
    %1410 = vdwg.mxu0
    %v1411 = vmul.f32 %v1408, 0.17677669
    %1412 = vmatprep.subr.mxu0 0.0
    %1413 = vmatpush1.xpose.msra.mxu0 %v1333
    %1414 = vmatprep.subr.mxu0 0.0
    %1415 = vmatpush1.xpose.msra.mxu0 0.0
    %1416 = vmatprep.subr.mxu0 0.0
    %1417 = vmatpush1.xpose.msra.mxu0 0.0
    %1418 = vmatprep.subr.mxu0 0.0
    %1419 = vmatpush1.xpose.msra.mxu0 0.0
    %1420 = vmatprep.subr.mxu0 0.0
    %1421 = vmatpush1.xpose.msra.mxu0 0.0
    %1422 = vmatprep.subr.mxu0 0.0
    %1423 = vmatpush1.xpose.msra.mxu0 0.0
    %1424 = vmatprep.subr.mxu0 0.0
    %1425 = vmatpush1.xpose.msra.mxu0 0.0
    %1426 = vmatprep.subr.mxu0 0.0
    %1427 = vmatpush1.xpose.msra.mxu0 0.0
    %1428 = vmatprep.subr.mxu0 0.0
    %1429 = vmatpush1.xpose.msra.mxu0 0.0
    %1430 = vmatprep.subr.mxu0 0.0
    %1431 = vmatpush1.xpose.msra.mxu0 0.0
    %1432 = vmatprep.subr.mxu0 0.0
    %1433 = vmatpush1.xpose.msra.mxu0 0.0
    %1434 = vmatprep.subr.mxu0 0.0
    %1435 = vmatpush1.xpose.msra.mxu0 0.0
    %1436 = vmatprep.subr.mxu0 0.0
    %1437 = vmatpush1.xpose.msra.mxu0 0.0
    %1438 = vmatprep.subr.mxu0 0.0
    %1439 = vmatpush1.xpose.msra.mxu0 0.0
    %1440 = vmatprep.subr.mxu0 0.0
    %1441 = vmatpush1.xpose.msra.mxu0 0.0
    %1442 = vmatprep.subr.mxu0 0.0
    %1443 = vmatpush1.xpose.msra.mxu0 0.0
    %1444 = vmatprep.subr.mxu0 0.0
    %1445 = vmatpush1.xpose.msra.mxu0 0.0
    %1446 = vmatprep.subr.mxu0 0.0
    %1447 = vmatpush1.xpose.msra.mxu0 0.0
    %1448 = vmatprep.subr.mxu0 0.0
    %1449 = vmatpush1.xpose.msra.mxu0 0.0
    %1450 = vmatprep.subr.mxu0 0.0
    %1451 = vmatpush1.xpose.msra.mxu0 0.0
    %1452 = vmatprep.subr.mxu0 0.0
    %1453 = vmatpush1.xpose.msra.mxu0 0.0
    %1454 = vmatprep.subr.mxu0 0.0
    %1455 = vmatpush1.xpose.msra.mxu0 0.0
    %1456 = vmatprep.subr.mxu0 0.0
    %1457 = vmatpush1.xpose.msra.mxu0 0.0
    %1458 = vmatprep.subr.mxu0 0.0
    %1459 = vmatpush1.xpose.msra.mxu0 0.0
    %1460 = vmatprep.subr.mxu0 0.0
    %1461 = vmatpush1.xpose.msra.mxu0 0.0
    %1462 = vmatprep.subr.mxu0 0.0
    %1463 = vmatpush1.xpose.msra.mxu0 0.0
    %1464 = vmatprep.subr.mxu0 0.0
    %1465 = vmatpush1.xpose.msra.mxu0 0.0
    %1466 = vmatprep.subr.mxu0 0.0
    %1467 = vmatpush1.xpose.msra.mxu0 0.0
    %1468 = vmatprep.subr.mxu0 0.0
    %1469 = vmatpush1.xpose.msra.mxu0 0.0
    %1470 = vmatprep.subr.mxu0 0.0
    %1471 = vmatpush1.xpose.msra.mxu0 0.0
    %1472 = vmatprep.subr.mxu0 0.0
    %1473 = vmatpush1.xpose.msra.mxu0 0.0
    %1474 = vmatprep.subr.mxu0 0.0
    %1475 = vmatpush1.xpose.msra.mxu0 0.0
    %1476 = vmatprep.mubr.f32.mxu0 0.0
    %1477 = vmatmul.mubr.f32.gmra.mrb[0].mxu0 %v1336
    %v1478 = vpop.f32.mrb[0].mxu0
    %v1479 = vadd.f32 0.0, %v1478
    %v1480 = vpop.f32.mrb[0].mxu0
    %1481 = vmatprep.mubr.f32.mxu0 0.0
    %1482 = vmatmul.mubr.f32.gmra.mrb[0].mxu0 %v1339
    %v1483 = vpop.f32.mrb[0].mxu0
    %v1484 = vadd.f32 0.0, %v1483
    %v1485 = vpop.f32.mrb[0].mxu0
    %1486 = vdwg.mxu0
    %v1487 = vmul.f32 %v1479, 0.17677669
    %v1488 = vmul.f32 %v1484, 0.17677669
    %v1489 = vsel %vm1260, 1, 0
    %v1490 = vlaneseq
    %v1491 = vshrl.u32 %v1490, 7
    %v1492 = vsub.s32 0, %v1491
    %v1493 = vrot.slane %v1489, %v1492
    %vm1494 = vcmp.eq.s32.totalorder %v1493, 1
    %v1495 = vsel %vm1494, -1e+30, %v1411
    %v1496 = vsel %vm781, %v1495, -inf
    %1497 = vmax.xlane.f32.xlu0 %v1496
    %v1498 = vpop.xlane.xlu0 %1497
    %v1499 = vsub.f32 %v1495, %v1498
    %v1500 = vmul.f32 %v1499, 1.442695
    %v1501 = vpow.pop %v1500
    %v1502 = vsel %vm781, %v1501, 0.0
    %1503 = vadd.xlane.f32.xlu0 %v1502
    %v1504 = vpop.xlane.xlu0 %1503
    %v1505 = vrcp.pop %v1504
    %v1506 = vmul.f32 %v1504, %v1505
    %v1507 = vsub.f32 2.0, %v1506
    %v1508 = vmul.f32 %v1505, %v1507
    %v1509 = vmul.f32 %v1501, %v1508
    %v1510 = vsel %vm1181, 1, 0
    %vm1511 = vcmp.eq.s32.totalorder %v1510, 1
    %v1512 = vsel %vm1511, 0.0, %v1509
    %v1513 = vsel %vm1331, 1, 0
    %v1514 = vlaneseq
    %v1515 = vshrl.u32 %v1514, 7
    %v1516 = vsub.s32 0, %v1515
    %v1517 = vrot.slane %v1513, %v1516
    %vm1518 = vcmp.eq.s32.totalorder %v1517, 1
    %v1519 = vsel %vm1518, -1e+30, %v1487
    %v1520 = vsel %vm1518, -1e+30, %v1488
    %v1521 = vsel %vm807, %v1519, -inf
    %1522 = vmax.xlane.f32.xlu0 %v1521
    %v1523 = vpop.xlane.xlu0 %1522
    %v1524 = vsel %vm807, %v1520, -inf
    %1525 = vmax.xlane.f32.xlu0 %v1524
    %v1526 = vpop.xlane.xlu0 %1525
    %v1527 = vsub.f32 %v1519, %v1523
    %v1528 = vsub.f32 %v1520, %v1526
    %v1529 = vmul.f32 %v1527, 1.442695
    %v1530 = vpow.pop %v1529
    %v1531 = vmul.f32 %v1528, 1.442695
    %v1532 = vpow.pop %v1531
    %v1533 = vsel %vm807, %v1530, 0.0
    %1534 = vadd.xlane.f32.xlu0 %v1533
    %v1535 = vpop.xlane.xlu0 %1534
    %v1536 = vsel %vm807, %v1532, 0.0
    %1537 = vadd.xlane.f32.xlu0 %v1536
    %v1538 = vpop.xlane.xlu0 %1537
    %v1539 = vrcp.pop %v1535
    %v1540 = vrcp.pop %v1538
    %v1541 = vmul.f32 %v1535, %v1539
    %v1542 = vmul.f32 %v1538, %v1540
    %v1543 = vsub.f32 2.0, %v1541
    %v1544 = vsub.f32 2.0, %v1542
    %v1545 = vmul.f32 %v1539, %v1543
    %v1546 = vmul.f32 %v1540, %v1544
    %v1547 = vmul.f32 %v1530, %v1545
    %v1548 = vmul.f32 %v1532, %v1546
    %v1549 = vsel %vm1188, 1, 0
    %v1550 = vsel %vm1189, 1, 0
    %vm1551 = vcmp.eq.s32.totalorder %v1549, 1
    %vm1552 = vcmp.eq.s32.totalorder %v1550, 1
    %v1553 = vsel %vm1551, 0.0, %v1547
    %v1554 = vsel %vm1552, 0.0, %v1548
    %s1555 = scalar_lea.vmem [#allocation9], 8
    %v1556 = vld [vmem:[%s1555] sm:$0xff]
    %v1557 = vmul.f32 %v1556, 0.17677669
    %v1558 = vsel %vm1494, -1e+30, %v1557
    %v1559 = vsel %vm781, %v1558, -inf
    %1560 = vmax.xlane.f32.xlu0 %v1559
    %v1561 = vpop.xlane.xlu0 %1560
    %v1562 = vsub.f32 %v1558, %v1561
    %v1563 = vmul.f32 %v1562, 1.442695
    %v1564 = vpow.pop %v1563
    %v1565 = vsel %vm781, %v1564, 0.0
    %1566 = vadd.xlane.f32.xlu0 %v1565
    %v1567 = vpop.xlane.xlu0 %1566
    %v1568 = vrcp.pop %v1567
    %v1569 = vmul.f32 %v1567, %v1568
    %v1570 = vsub.f32 2.0, %v1569
    %v1571 = vmul.f32 %v1568, %v1570
    %v1572 = vmul.f32 %v1564, %v1571
    %v1573 = vsel %vm1511, 0.0, %v1572
    %s1574 = scalar_lea.vmem %s7, 16
    %v1575 = vld [vmem:[%s1574] sm:$0xff]
    %v1576 = vld [vmem:[%s1574 + $0x8] sm:$0xff]
    %v1577 = vmul.f32 %v1575, 0.17677669
    %v1578 = vmul.f32 %v1576, 0.17677669
    %v1579 = vsel %vm1518, -1e+30, %v1577
    %v1580 = vsel %vm1518, -1e+30, %v1578
    %v1581 = vsel %vm807, %v1579, -inf
    %1582 = vmax.xlane.f32.xlu0 %v1581
    %v1583 = vpop.xlane.xlu0 %1582
    %v1584 = vsel %vm807, %v1580, -inf
    %1585 = vmax.xlane.f32.xlu0 %v1584
    %v1586 = vpop.xlane.xlu0 %1585
    %v1587 = vsub.f32 %v1579, %v1583
    %v1588 = vsub.f32 %v1580, %v1586
    %v1589 = vmul.f32 %v1587, 1.442695
    %v1590 = vpow.pop %v1589
    %v1591 = vmul.f32 %v1588, 1.442695
    %v1592 = vpow.pop %v1591
    %v1593 = vsel %vm807, %v1590, 0.0
    %1594 = vadd.xlane.f32.xlu0 %v1593
    %v1595 = vpop.xlane.xlu0 %1594
    %v1596 = vsel %vm807, %v1592, 0.0
    %1597 = vadd.xlane.f32.xlu0 %v1596
    %v1598 = vpop.xlane.xlu0 %1597
    %v1599 = vrcp.pop %v1595
    %v1600 = vrcp.pop %v1598
    %v1601 = vmul.f32 %v1595, %v1599
    %v1602 = vmul.f32 %v1598, %v1600
    %v1603 = vsub.f32 2.0, %v1601
    %v1604 = vsub.f32 2.0, %v1602
    %v1605 = vmul.f32 %v1599, %v1603
    %v1606 = vmul.f32 %v1600, %v1604
    %v1607 = vmul.f32 %v1590, %v1605
    %v1608 = vmul.f32 %v1592, %v1606
    %v1609 = vsel %vm1551, 0.0, %v1607
    %v1610 = vsel %vm1552, 0.0, %v1608
    %v1612 = vsel %vm781, %v1512, 0
    %v1615 = vsel %vm781, %v1573, 0
    %1617 = vmatprep.subr.mxu0 0.0
    %1618 = vmatpush1.msra.mxu0 %v452
    %1619 = vmatprep.subr.mxu0 0.0
    %1620 = vmatpush1.msra.mxu0 %v457
    %1621 = vmatprep.subr.mxu0 0.0
    %1622 = vmatpush1.msra.mxu0 0.0
    %1623 = vmatprep.subr.mxu0 0.0
    %1624 = vmatpush1.msra.mxu0 0.0
    %1625 = vmatprep.subr.mxu0 0.0
    %1626 = vmatpush1.msra.mxu0 0.0
    %1627 = vmatprep.subr.mxu0 0.0
    %1628 = vmatpush1.msra.mxu0 0.0
    %1629 = vmatprep.subr.mxu0 0.0
    %1630 = vmatpush1.msra.mxu0 0.0
    %1631 = vmatprep.subr.mxu0 0.0
    %1632 = vmatpush1.msra.mxu0 0.0
    %1633 = vmatprep.subr.mxu0 0.0
    %1634 = vmatpush1.msra.mxu0 0.0
    %1635 = vmatprep.subr.mxu0 0.0
    %1636 = vmatpush1.msra.mxu0 0.0
    %1637 = vmatprep.subr.mxu0 0.0
    %1638 = vmatpush1.msra.mxu0 0.0
    %1639 = vmatprep.subr.mxu0 0.0
    %1640 = vmatpush1.msra.mxu0 0.0
    %1641 = vmatprep.subr.mxu0 0.0
    %1642 = vmatpush1.msra.mxu0 0.0
    %1643 = vmatprep.subr.mxu0 0.0
    %1644 = vmatpush1.msra.mxu0 0.0
    %1645 = vmatprep.subr.mxu0 0.0
    %1646 = vmatpush1.msra.mxu0 0.0
    %1647 = vmatprep.subr.mxu0 0.0
    %1648 = vmatpush1.msra.mxu0 0.0
    %1649 = vmatprep.subr.mxu0 0.0
    %1650 = vmatpush1.msra.mxu0 0.0
    %1651 = vmatprep.subr.mxu0 0.0
    %1652 = vmatpush1.msra.mxu0 0.0
    %1653 = vmatprep.subr.mxu0 0.0
    %1654 = vmatpush1.msra.mxu0 0.0
    %1655 = vmatprep.subr.mxu0 0.0
    %1656 = vmatpush1.msra.mxu0 0.0
    %1657 = vmatprep.subr.mxu0 0.0
    %1658 = vmatpush1.msra.mxu0 0.0
    %1659 = vmatprep.subr.mxu0 0.0
    %1660 = vmatpush1.msra.mxu0 0.0
    %1661 = vmatprep.subr.mxu0 0.0
    %1662 = vmatpush1.msra.mxu0 0.0
    %1663 = vmatprep.subr.mxu0 0.0
    %1664 = vmatpush1.msra.mxu0 0.0
    %1665 = vmatprep.subr.mxu0 0.0
    %1666 = vmatpush1.msra.mxu0 0.0
    %1667 = vmatprep.subr.mxu0 0.0
    %1668 = vmatpush1.msra.mxu0 0.0
    %1669 = vmatprep.subr.mxu0 0.0
    %1670 = vmatpush1.msra.mxu0 0.0
    %1671 = vmatprep.subr.mxu0 0.0
    %1672 = vmatpush1.msra.mxu0 0.0
    %1673 = vmatprep.subr.mxu0 0.0
    %1674 = vmatpush1.msra.mxu0 0.0
    %1675 = vmatprep.subr.mxu0 0.0
    %1676 = vmatpush1.msra.mxu0 0.0
    %1677 = vmatprep.subr.mxu0 0.0
    %1678 = vmatpush1.msra.mxu0 0.0
    %1679 = vmatprep.subr.mxu0 0.0
    %1680 = vmatpush1.msra.mxu0 0.0
    %1681 = vmatprep.mubr.f32.mxu0 0.0
    %1682 = vmatmul.mubr.f32.gmra.mrb[0].mxu0 %v1612
    %v1683 = vpop.f32.mrb[0].mxu0
    %v1684 = vadd.f32 0.0, %v1683
    %v1685 = vpop.f32.mrb[0].mxu0
    %1686 = vmatprep.mubr.f32.mxu0 0.0
    %1687 = vmatmul.mubr.f32.gmra.mrb[0].mxu0 %v1615
    %v1688 = vpop.f32.mrb[0].mxu0
    %v1689 = vadd.f32 0.0, %v1688
    %v1690 = vpop.f32.mrb[0].mxu0
    %1691 = vdwg.mxu0
    %v1693 = vsel %vm807, %v1553, 0
    %v1696 = vsel %vm807, %v1554, 0
    %v1699 = vsel %vm807, %v1609, 0
    %v1702 = vsel %vm807, %v1610, 0
    %1704 = vmatprep.subr.mxu0 0.0
    %1705 = vmatpush1.msra.mxu0 %v368
    %1706 = vmatprep.subr.mxu0 0.0
    %1707 = vmatpush1.msra.mxu0 0.0
    %1708 = vmatprep.subr.mxu0 0.0
    %1709 = vmatpush1.msra.mxu0 0.0
    %1710 = vmatprep.subr.mxu0 0.0
    %1711 = vmatpush1.msra.mxu0 0.0
    %1712 = vmatprep.subr.mxu0 0.0
    %1713 = vmatpush1.msra.mxu0 0.0
    %1714 = vmatprep.subr.mxu0 0.0
    %1715 = vmatpush1.msra.mxu0 0.0
    %1716 = vmatprep.subr.mxu0 0.0
    %1717 = vmatpush1.msra.mxu0 0.0
    %1718 = vmatprep.subr.mxu0 0.0
    %1719 = vmatpush1.msra.mxu0 0.0
    %1720 = vmatprep.subr.mxu0 0.0
    %1721 = vmatpush1.msra.mxu0 0.0
    %1722 = vmatprep.subr.mxu0 0.0
    %1723 = vmatpush1.msra.mxu0 0.0
    %1724 = vmatprep.subr.mxu0 0.0
    %1725 = vmatpush1.msra.mxu0 0.0
    %1726 = vmatprep.subr.mxu0 0.0
    %1727 = vmatpush1.msra.mxu0 0.0
    %1728 = vmatprep.subr.mxu0 0.0
    %1729 = vmatpush1.msra.mxu0 0.0
    %1730 = vmatprep.subr.mxu0 0.0
    %1731 = vmatpush1.msra.mxu0 0.0
    %1732 = vmatprep.subr.mxu0 0.0
    %1733 = vmatpush1.msra.mxu0 0.0
    %1734 = vmatprep.subr.mxu0 0.0
    %1735 = vmatpush1.msra.mxu0 0.0
    %1736 = vmatprep.subr.mxu0 0.0
    %1737 = vmatpush1.msra.mxu0 0.0
    %1738 = vmatprep.subr.mxu0 0.0
    %1739 = vmatpush1.msra.mxu0 0.0
    %1740 = vmatprep.subr.mxu0 0.0
    %1741 = vmatpush1.msra.mxu0 0.0
    %1742 = vmatprep.subr.mxu0 0.0
    %1743 = vmatpush1.msra.mxu0 0.0
    %1744 = vmatprep.subr.mxu0 0.0
    %1745 = vmatpush1.msra.mxu0 0.0
    %1746 = vmatprep.subr.mxu0 0.0
    %1747 = vmatpush1.msra.mxu0 0.0
    %1748 = vmatprep.subr.mxu0 0.0
    %1749 = vmatpush1.msra.mxu0 0.0
    %1750 = vmatprep.subr.mxu0 0.0
    %1751 = vmatpush1.msra.mxu0 0.0
    %1752 = vmatprep.subr.mxu0 0.0
    %1753 = vmatpush1.msra.mxu0 0.0
    %1754 = vmatprep.subr.mxu0 0.0
    %1755 = vmatpush1.msra.mxu0 0.0
    %1756 = vmatprep.subr.mxu0 0.0
    %1757 = vmatpush1.msra.mxu0 0.0
    %1758 = vmatprep.subr.mxu0 0.0
    %1759 = vmatpush1.msra.mxu0 0.0
    %1760 = vmatprep.subr.mxu0 0.0
    %1761 = vmatpush1.msra.mxu0 0.0
    %1762 = vmatprep.subr.mxu0 0.0
    %1763 = vmatpush1.msra.mxu0 0.0
    %1764 = vmatprep.subr.mxu0 0.0
    %1765 = vmatpush1.msra.mxu0 0.0
    %1766 = vmatprep.subr.mxu0 0.0
    %1767 = vmatpush1.msra.mxu0 0.0
    %1768 = vmatprep.mubr.f32.mxu0 0.0
    %1769 = vmatmul.mubr.f32.gmra.mrb[0].mxu0 %v1693
    %v1770 = vpop.f32.mrb[0].mxu0
    %v1771 = vadd.f32 0.0, %v1770
    %v1772 = vpop.f32.mrb[0].mxu0
    %1773 = vmatprep.mubr.f32.mxu0 0.0
    %1774 = vmatmul.mubr.f32.gmra.mrb[0].mxu0 %v1696
    %v1775 = vpop.f32.mrb[0].mxu0
    %v1776 = vadd.f32 0.0, %v1775
    %v1777 = vpop.f32.mrb[0].mxu0
    %1778 = vmatprep.mubr.f32.mxu0 0.0
    %1779 = vmatmul.mubr.f32.gmra.mrb[0].mxu0 %v1699
    %v1780 = vpop.f32.mrb[0].mxu0
    %v1781 = vadd.f32 0.0, %v1780
    %v1782 = vpop.f32.mrb[0].mxu0
    %1783 = vmatprep.mubr.f32.mxu0 0.0
    %1784 = vmatmul.mubr.f32.gmra.mrb[0].mxu0 %v1702
    %v1785 = vpop.f32.mrb[0].mxu0
    %v1786 = vadd.f32 0.0, %v1785
    %v1787 = vpop.f32.mrb[0].mxu0
    %1788 = vdwg.mxu0
    %v1789 = vadd.f32 %v1684, %v100
    %v1790 = vsel %vm109, %v1789, 0.0
    %1791 = vadd.xlane.f32.xlu0 %v1790
    %v1792 = vpop.xlane.xlu0 %1791
    %v1793 = vmul.f32 %v1792, %v1078
    %v1794 = vsub.f32 %v1789, %v1793
    %v1795 = vmul.f32 %v1794, %v1794
    %v1796 = vsel %vm109, %v1795, 0.0
    %1797 = vadd.xlane.f32.xlu0 %v1796
    %v1798 = vpop.xlane.xlu0 %1797
    %v1799 = vmul.f32 %v1798, %v1078
    %v1800 = vadd.f32 %v1799, 1e-05
    %v1801 = vrsqrt.pop %v1800
    %v1802 = vmul.f32 %v1794, %v1801
    %v1803 = vadd.f32 %v1689, %v100
    %v1804 = vsel %vm109, %v1803, 0.0
    %1805 = vadd.xlane.f32.xlu0 %v1804
    %v1806 = vpop.xlane.xlu0 %1805
    %v1807 = vmul.f32 %v1806, %v1078
    %v1808 = vsub.f32 %v1803, %v1807
    %v1809 = vmul.f32 %v1808, %v1808
    %v1810 = vsel %vm109, %v1809, 0.0
    %1811 = vadd.xlane.f32.xlu0 %v1810
    %v1812 = vpop.xlane.xlu0 %1811
    %v1813 = vmul.f32 %v1812, %v1078
    %v1814 = vadd.f32 %v1813, 1e-05
    %v1815 = vrsqrt.pop %v1814
    %v1816 = vmul.f32 %v1808, %v1815
    %1818 = vrot.lane.b32.xlu0 %v1816, 32
    %v1819 = vpop.permute.xlu0 %1818
    %v1821 = vsel %vm109, %v1802, %v1819
    %s1822 = scalar_lea.vmem %s8, 8
    %1823 = vst.msk [vmem:[%s1822] sm:$0xff] %vm1108, %v1821
    %v1824 = vadd.f32 %v1771, %v103
    %v1825 = vadd.f32 %v1776, %v104
    %v1826 = vsel %vm109, %v1824, 0.0
    %1827 = vadd.xlane.f32.xlu0 %v1826
    %v1828 = vpop.xlane.xlu0 %1827
    %v1829 = vsel %vm109, %v1825, 0.0
    %1830 = vadd.xlane.f32.xlu0 %v1829
    %v1831 = vpop.xlane.xlu0 %1830
    %v1832 = vmul.f32 %v1828, %v1078
    %v1833 = vmul.f32 %v1831, %v1078
    %v1834 = vsub.f32 %v1824, %v1832
    %v1835 = vsub.f32 %v1825, %v1833
    %v1836 = vmul.f32 %v1834, %v1834
    %v1837 = vmul.f32 %v1835, %v1835
    %v1838 = vsel %vm109, %v1836, 0.0
    %1839 = vadd.xlane.f32.xlu0 %v1838
    %v1840 = vpop.xlane.xlu0 %1839
    %v1841 = vsel %vm109, %v1837, 0.0
    %1842 = vadd.xlane.f32.xlu0 %v1841
    %v1843 = vpop.xlane.xlu0 %1842
    %v1844 = vmul.f32 %v1840, %v1078
    %v1845 = vmul.f32 %v1843, %v1078
    %v1846 = vadd.f32 %v1844, 1e-05
    %v1847 = vadd.f32 %v1845, 1e-05
    %v1848 = vrsqrt.pop %v1846
    %v1849 = vrsqrt.pop %v1847
    %v1850 = vmul.f32 %v1834, %v1848
    %v1851 = vmul.f32 %v1835, %v1849
    %v1852 = vadd.f32 %v1781, %v103
    %v1853 = vadd.f32 %v1786, %v104
    %v1854 = vsel %vm109, %v1852, 0.0
    %1855 = vadd.xlane.f32.xlu0 %v1854
    %v1856 = vpop.xlane.xlu0 %1855
    %v1857 = vsel %vm109, %v1853, 0.0
    %1858 = vadd.xlane.f32.xlu0 %v1857
    %v1859 = vpop.xlane.xlu0 %1858
    %v1860 = vmul.f32 %v1856, %v1078
    %v1861 = vmul.f32 %v1859, %v1078
    %v1862 = vsub.f32 %v1852, %v1860
    %v1863 = vsub.f32 %v1853, %v1861
    %v1864 = vmul.f32 %v1862, %v1862
    %v1865 = vmul.f32 %v1863, %v1863
    %v1866 = vsel %vm109, %v1864, 0.0
    %1867 = vadd.xlane.f32.xlu0 %v1866
    %v1868 = vpop.xlane.xlu0 %1867
    %v1869 = vsel %vm109, %v1865, 0.0
    %1870 = vadd.xlane.f32.xlu0 %v1869
    %v1871 = vpop.xlane.xlu0 %1870
    %v1872 = vmul.f32 %v1868, %v1078
    %v1873 = vmul.f32 %v1871, %v1078
    %v1874 = vadd.f32 %v1872, 1e-05
    %v1875 = vadd.f32 %v1873, 1e-05
    %v1876 = vrsqrt.pop %v1874
    %v1877 = vrsqrt.pop %v1875
    %v1878 = vmul.f32 %v1862, %v1876
    %v1879 = vmul.f32 %v1863, %v1877
    %1882 = vrot.lane.b32.xlu0 %v1878, 32
    %v1883 = vpop.permute.xlu0 %1882
    %1884 = vrot.lane.b32.xlu0 %v1879, 32
    %v1885 = vpop.permute.xlu0 %1884
    %v1888 = vsel %vm109, %v1850, %v1883
    %v1889 = vsel %vm109, %v1851, %v1885
    %s1890 = scalar_lea.vmem %s9, 16
    %1891 = vst.msk [vmem:[%s1890] sm:$0xff] %vm1108, %v1888
    %1892 = vst.msk [vmem:[%s1890 + $0x8] sm:$0xff] %vm1108, %v1889
    // Predicated region
    $region54: #{co_attention_layer_counter.1} parent=1 // pred_check
      _
    $region55: #{co_attention_layer_counter.1} parent=1 // pred_check_branch
      %1894 = sbr.rel (0) target = $region57
    $region56: #{co_attention_layer_counter.1} parent=1 // pred_region
      _
    $region57: #{co_attention_layer_counter.1} parent=1 // pred_fallthru
      _
    // Predicated region
    $region58: #{co_attention_layer_counter.1} parent=1 // pred_check
      _
    $region59: #{co_attention_layer_counter.1} parent=1 // pred_check_branch
      %1896 = sbr.rel (0) target = $region61
    $region60: #{co_attention_layer_counter.1} parent=1 // pred_region
      _
    $region61: #{co_attention_layer_counter.1} parent=1 // pred_fallthru
      _
    // Predicated region
    $region62: #{co_attention_layer_counter.1} parent=1 // pred_check
      _
    $region63: #{co_attention_layer_counter.1} parent=1 // pred_check_branch
      %1898 = sbr.rel (0) target = $region65
    $region64: #{co_attention_layer_counter.1} parent=1 // pred_region
      _
    $region65: #{co_attention_layer_counter.1} parent=1 // pred_fallthru
      _
    // Predicated region
    $region66: #{co_attention_layer_counter.1} parent=1 // pred_check
      _
    $region67: #{co_attention_layer_counter.1} parent=1 // pred_check_branch
      %1900 = sbr.rel (0) target = $region69
    $region68: #{co_attention_layer_counter.1} parent=1 // pred_region
      _
    $region69: #{co_attention_layer_counter.1} parent=1 // pred_fallthru
      _
    %1901 = vsyncpa [#allocation3], 1
    %1902 = vsyncpa [#allocation5], 1
    %1903 = vsyncpa [#allocation8], 1

</llo_original>
